<compile_context>
chip_gen: v6e
topology: v6e:2x2x1
jax: 0.10.0
libtpu: 0.0.40
codegen_flags: <defaults>
</compile_context>

<pallas_src>
import jax
import jax.numpy as jnp
from jax.experimental import pallas as pl
from jax.experimental.pallas import tpu as pltpu


def _round_up(x, m):
    return (x + m - 1) // m * m


def feel_inter_kernel(delta_ref, xe_ref, w_ref, u_ref, b_ref, out_ref, xproj_ref):
    """One batch tile of the FEELModel_inter forward.

    delta_ref : [1, 1]           f32  (SMEM) margin delta
    xe_ref    : [L, 3, Bt, E]    bf16 (q/p/n stacked on axis 1, seq-major)
    w_ref     : [E, 4H]          bf16 fused [W_iou | W_f]
    u_ref     : [H, 4H]          bf16 fused [U_iou | U_f]
    b_ref     : [1, 4H]          f32  fused [b_iou | b_f]
    out_ref   : [1, 1, Bt]       f32  relu(delta - cos(q,p) + cos(q,n))
    xproj_ref : [L, 3*Bt, 4H]    f32  VMEM scratch (precomputed x-projections)
    """
    L, _three, Bt, E = xe_ref.shape
    H = u_ref.shape[0]
    G = 4 * H
    M = 3 * Bt

    w_all = w_ref[...]
    u_all = u_ref[...]
    b_all = b_ref[...]
    delta = delta_ref[0, 0]

    # ---- Hoisted input projection: one large MXU matmul covering all
    # timesteps and all three sequences, biases folded in.
    x_flat = xe_ref[...].reshape(L * M, E)                                 # bf16
    xproj = jnp.dot(x_flat, w_all, preferred_element_type=jnp.float32) + b_all
    xproj_ref[...] = xproj.reshape(L, M, G)

    # Lane mask for the u-gate lanes [2H, 3H): tanh there, sigmoid elsewhere.
    lane = jax.lax.broadcasted_iota(jnp.int32, (M, G), 1)
    u_lanes = (lane >= 2 * H) & (lane < 3 * H)

    def step(j, carry):
        c_prev, h_prev = carry                       # c: [M,H] f32, h: [M,H] bf16
        gates = xproj_ref[j] + jnp.dot(h_prev, u_all,
                                       preferred_element_type=jnp.float32)
        # Child-Sum gate activations on the full [M,4H] vreg.
        act = jnp.where(u_lanes, jnp.tanh(gates), jax.nn.sigmoid(gates))
        i_g = act[:, 0:H]
        o_g = act[:, H:2 * H]
        u_g = act[:, 2 * H:3 * H]
        f_g = act[:, 3 * H:4 * H]
        c = i_g * u_g + f_g * c_prev                 # single child: f ⊙ c_child
        h = (o_g * jnp.tanh(c)).astype(jnp.bfloat16)
        return (c, h)

    c0 = jnp.zeros((M, H), jnp.float32)
    h0 = jnp.zeros((M, H), jnp.bfloat16)
    c_root, _h_root = jax.lax.fori_loop(0, L, step, (c0, h0), unroll=True)

    qc = c_root[0:Bt]
    pc = c_root[Bt:2 * Bt]
    nc = c_root[2 * Bt:3 * Bt]

    def _cos(a, b, eps=1e-8):
        num = jnp.sum(a * b, axis=1, keepdims=True)
        na = jnp.sqrt(jnp.sum(a * a, axis=1, keepdims=True))
        nb = jnp.sqrt(jnp.sum(b * b, axis=1, keepdims=True))
        return num / jnp.maximum(na * nb, eps)                             # [Bt, 1]

    a_sim = _cos(qc, pc)
    b_sim = _cos(qc, nc)
    res = jnp.maximum(delta - a_sim + b_sim, 0.0)                          # [Bt, 1]
    # Lane-dense store: batch rows on the lane axis.
    out_ref[...] = jnp.transpose(res).reshape(1, 1, Bt)


def feel_model_inter_forward(params, query_ids, pos_ids, neg_ids, delta=1.0):
    B = query_ids.shape[0]
    # mirror: query.view(B, 1, -1).squeeze(1)
    query = query_ids.reshape(B, -1)
    pos = pos_ids.reshape(B, -1)
    neg = neg_ids.reshape(B, -1)
    L = query.shape[1]

    emb = params["embeddings"]                                   # [V, E]
    E = emb.shape[1]
    H = params["u_f"].shape[0]
    G = 4 * H

    # Fused gate weights (bf16 for the MXU; biases stay f32).
    w_all = jnp.concatenate([params["w_iou"], params["w_f"]], axis=1).astype(jnp.bfloat16)
    u_all = jnp.concatenate([params["u_iou"], params["u_f"]], axis=1).astype(jnp.bfloat16)
    b_all = jnp.concatenate([params["b_iou"], params["b_f"]], axis=1).astype(jnp.float32)

    # Embedding lookup (glue) + stack q/p/n, seq-major: [L, 3, B, E].
    q_e = emb[query]
    p_e = emb[pos]
    n_e = emb[neg]                                               # [B, L, E]
    x = jnp.stack([q_e, p_e, n_e], axis=0)                       # [3, B, L, E]
    x = jnp.transpose(x, (2, 0, 1, 3))                           # [L, 3, B, E]

    # Pad batch to a sublane-friendly tile and pick a batch tile size.
    B_tile = min(_round_up(B, 8), 64)
    B_pad = _round_up(B, B_tile)
    if B_pad != B:
        x = jnp.pad(x, ((0, 0), (0, 0), (0, B_pad - B), (0, 0)))
    x = x.astype(jnp.bfloat16)
    n_tiles = B_pad // B_tile

    delta_arr = jnp.full((1, 1), delta, jnp.float32)

    # VMEM budget estimate (x block double-buffered, weights, xproj scratch),
    # capped at 64 MiB so it is safe on v7x as well as v5e/v6e.
    x_block_bytes = L * 3 * B_tile * E * 2
    scratch_bytes = L * 3 * B_tile * G * 4
    w_bytes = (E * G + H * G) * 2 + G * 4
    est = 2 * x_block_bytes + 2 * w_bytes + scratch_bytes
    vmem_limit = int(min(64 * 1024 * 1024, max(32 * 1024 * 1024, 4 * est)))

    out = pl.pallas_call(
        feel_inter_kernel,
        out_shape=jax.ShapeDtypeStruct((n_tiles, 1, B_tile), jnp.float32),
        grid_spec=pltpu.PrefetchScalarGridSpec(
            num_scalar_prefetch=0,
            grid=(n_tiles,),
            in_specs=[
                pl.BlockSpec(memory_space=pltpu.MemorySpace.SMEM),        # delta
                pl.BlockSpec((L, 3, B_tile, E), lambda i: (0, 0, i, 0)),  # embeddings
                pl.BlockSpec((E, G), lambda i: (0, 0)),                   # W_all
                pl.BlockSpec((H, G), lambda i: (0, 0)),                   # U_all
                pl.BlockSpec((1, G), lambda i: (0, 0)),                   # b_all
            ],
            out_specs=pl.BlockSpec((1, 1, B_tile), lambda i: (i, 0, 0)),
            scratch_shapes=[pltpu.VMEM((L, 3 * B_tile, G), jnp.float32)],
        ),
        compiler_params=pltpu.CompilerParams(
            dimension_semantics=("parallel",),
            vmem_limit_bytes=vmem_limit,
        ),
    )(delta_arr, x, w_all, u_all, b_all)

    return out.reshape(n_tiles * B_tile)[:B]                     # [B]


def init_params(key, vocab_size, embedding_dim, hidden_dim):
    """Deterministic synthetic parameter init (matches module's declared shapes)."""
    ks = jax.random.split(key, 7)
    E, H = embedding_dim, hidden_dim
    scale = 0.1
    return {
        "embeddings": scale * jax.random.normal(ks[0], (vocab_size, E), jnp.float32),
        "w_iou": scale * jax.random.normal(ks[1], (E, 3 * H), jnp.float32),
        "u_iou": scale * jax.random.normal(ks[2], (H, 3 * H), jnp.float32),
        "b_iou": jnp.zeros((1, 3 * H), jnp.float32),
        "w_f": scale * jax.random.normal(ks[3], (E, H), jnp.float32),
        "u_f": scale * jax.random.normal(ks[4], (H, H), jnp.float32),
        "b_f": jnp.zeros((1, H), jnp.float32),
    }


if __name__ == "__main__":
    B, L, E, H, V = 2, 8, 32, 32, 64
    delta = 1.0

    key = jax.random.PRNGKey(0)
    k_params, k_q, k_p, k_n = jax.random.split(key, 4)

    params = init_params(k_params, vocab_size=V, embedding_dim=E, hidden_dim=H)

    query_ids = jax.random.randint(k_q, (B, L), 0, V, dtype=jnp.int32)
    pos_ids = jax.random.randint(k_p, (B, L), 0, V, dtype=jnp.int32)
    neg_ids = jax.random.randint(k_n, (B, L), 0, V, dtype=jnp.int32)

    out = feel_model_inter_forward(params, query_ids, pos_ids, neg_ids, delta=delta)
    out = jax.block_until_ready(out)
    assert out.shape == (B,), out.shape
    print("KERNEL_OK")
</pallas_src>

<mosaic_0001>
module attributes {stable_mosaic.version = 11 : i64} {
  func.func @feel_inter_kernel(%arg0: i32, %arg1: memref<1x1xf32, #tpu.memory_space<smem>>, %arg2: memref<8x3x8x32xbf16, #tpu.memory_space<vmem>>, %arg3: memref<32x128xbf16, #tpu.memory_space<vmem>>, %arg4: memref<32x128xbf16, #tpu.memory_space<vmem>>, %arg5: memref<1x128xf32, #tpu.memory_space<vmem>>, %arg6: memref<1x1x8xf32, #tpu.memory_space<vmem>>, %arg7: memref<8x24x128xf32, #tpu.memory_space<vmem>>) attributes {dimension_semantics = [#tpu.dimension_semantics<parallel>], iteration_bounds = array<i64: 1>, scalar_prefetch = 0 : i64, scratch_operands = 1 : i64, tpu.core_type = #tpu.core_type<tc>, window_params = [{transform_indices = @transform_0, window_bounds = array<i64: 1, 1>}, {transform_indices = @transform_1, window_bounds = array<i64: 8, 3, 8, 32>}, {pipeline_mode = #tpu.pipeline_mode<synchronous>, transform_indices = @transform_2, window_bounds = array<i64: 32, 128>}, {pipeline_mode = #tpu.pipeline_mode<synchronous>, transform_indices = @transform_3, window_bounds = array<i64: 32, 128>}, {pipeline_mode = #tpu.pipeline_mode<synchronous>, transform_indices = @transform_4, window_bounds = array<i64: 1, 128>}, {transform_indices = @transform_5, window_bounds = array<i64: 1, 1, 8>}]} {
    %c0 = arith.constant 0 : index
    %c0_0 = arith.constant 0 : index
    %0 = vector.load %arg3[%c0, %c0_0] : memref<32x128xbf16, #tpu.memory_space<vmem>>, vector<32x128xbf16>
    %c0_1 = arith.constant 0 : index
    %c0_2 = arith.constant 0 : index
    %1 = vector.load %arg4[%c0_1, %c0_2] : memref<32x128xbf16, #tpu.memory_space<vmem>>, vector<32x128xbf16>
    %c0_3 = arith.constant 0 : index
    %c0_4 = arith.constant 0 : index
    %2 = vector.load %arg5[%c0_3, %c0_4] : memref<1x128xf32, #tpu.memory_space<vmem>>, vector<1x128xf32>
    %c0_5 = arith.constant 0 : index
    %c0_6 = arith.constant 0 : index
    %3 = memref.load %arg1[%c0_5, %c0_6] : memref<1x1xf32, #tpu.memory_space<smem>>
    %c0_7 = arith.constant 0 : index
    %c0_8 = arith.constant 0 : index
    %c0_9 = arith.constant 0 : index
    %c0_10 = arith.constant 0 : index
    %4 = vector.load %arg2[%c0_7, %c0_8, %c0_9, %c0_10] : memref<8x3x8x32xbf16, #tpu.memory_space<vmem>>, vector<8x3x8x32xbf16>
    %5 = vector.shape_cast %4 : vector<8x3x8x32xbf16> to vector<192x32xbf16>
    %cst = arith.constant dense<0.000000e+00> : vector<192x128xf32>
    %6 = tpu.matmul %5, %0, %cst {dimension_numbers = #tpu.dot_dimension_numbers<[1], [0], [0], [1], [0, 0, 1, 1], [], []>} : vector<192x32xbf16>, vector<32x128xbf16>, vector<192x128xf32> -> vector<192x128xf32>
    %7 = vector.broadcast %2 : vector<1x128xf32> to vector<192x128xf32>
    %8 = arith.addf %6, %7 : vector<192x128xf32>
    %9 = vector.shape_cast %8 : vector<192x128xf32> to vector<8x24x128xf32>
    %c0_11 = arith.constant 0 : index
    %c0_12 = arith.constant 0 : index
    %c0_13 = arith.constant 0 : index
    %10 = vector.load %arg7[%c0_11, %c0_12, %c0_13] : memref<8x24x128xf32, #tpu.memory_space<vmem>>, vector<8x24x128xf32>
    tpu.vector_store %arg7[%c0_11, %c0_12, %c0_13], %9 {strides = array<i32>} : memref<8x24x128xf32, #tpu.memory_space<vmem>>, vector<8x24x128xf32>,
    %11 = tpu.iota {dimensions = array<i32: 1>} : vector<24x128xi32>
    %c64_i32 = arith.constant 64 : i32
    %12 = vector.broadcast %c64_i32 : i32 to vector<24x128xi32>
    %13 = arith.cmpi sge, %11, %12 : vector<24x128xi32>
    %c96_i32 = arith.constant 96 : i32
    %14 = vector.broadcast %c96_i32 : i32 to vector<24x128xi32>
    %15 = arith.cmpi slt, %11, %14 : vector<24x128xi32>
    %16 = arith.andi %13, %15 : vector<24x128xi1>
    %cst_14 = arith.constant 0.000000e+00 : f32
    %17 = vector.broadcast %cst_14 : f32 to vector<24x32xf32>
    %cst_15 = arith.constant 0.000000e+00 : bf16
    %18 = vector.broadcast %cst_15 : bf16 to vector<24x32xbf16>
    %c0_i32 = arith.constant 0 : i32
    %19 = arith.index_cast %c0_i32 : i32 to index
    %c0_16 = arith.constant 0 : index
    %c0_17 = arith.constant 0 : index
    %20 = vector.load %arg7[%19, %c0_16, %c0_17] : memref<8x24x128xf32, #tpu.memory_space<vmem>>, vector<1x24x128xf32>
    %21 = vector.shape_cast %20 : vector<1x24x128xf32> to vector<24x128xf32>
    %cst_18 = arith.constant dense<0.000000e+00> : vector<24x128xf32>
    %22 = tpu.matmul %18, %1, %cst_18 {dimension_numbers = #tpu.dot_dimension_numbers<[1], [0], [0], [1], [0, 0, 1, 1], [], []>} : vector<24x32xbf16>, vector<32x128xbf16>, vector<24x128xf32> -> vector<24x128xf32>
    %23 = arith.addf %21, %22 : vector<24x128xf32>
    %24 = math.tanh %23 : vector<24x128xf32>
    %25 = arith.negf %23 : vector<24x128xf32>
    %26 = math.exp %25 : vector<24x128xf32>
    %cst_19 = arith.constant 1.000000e+00 : f32
    %27 = vector.broadcast %cst_19 : f32 to vector<24x128xf32>
    %28 = arith.addf %27, %26 : vector<24x128xf32>
    %29 = arith.divf %27, %28 : vector<24x128xf32>
    %30 = arith.select %16, %24, %29 : vector<24x128xi1>, vector<24x128xf32>
    %31 = vector.extract_strided_slice %30 {offsets = [0, 0], sizes = [24, 32], strides = [1, 1]} : vector<24x128xf32> to vector<24x32xf32>
    %32 = vector.extract_strided_slice %30 {offsets = [0, 32], sizes = [24, 32], strides = [1, 1]} : vector<24x128xf32> to vector<24x32xf32>
    %33 = vector.extract_strided_slice %30 {offsets = [0, 64], sizes = [24, 32], strides = [1, 1]} : vector<24x128xf32> to vector<24x32xf32>
    %34 = vector.extract_strided_slice %30 {offsets = [0, 96], sizes = [24, 32], strides = [1, 1]} : vector<24x128xf32> to vector<24x32xf32>
    %35 = arith.mulf %31, %33 : vector<24x32xf32>
    %36 = arith.mulf %34, %17 : vector<24x32xf32>
    %37 = arith.addf %35, %36 : vector<24x32xf32>
    %38 = math.tanh %37 : vector<24x32xf32>
    %39 = arith.mulf %32, %38 : vector<24x32xf32>
    %40 = arith.truncf %39 : vector<24x32xf32> to vector<24x32xbf16>
    %c1_i32 = arith.constant 1 : i32
    %41 = arith.index_cast %c1_i32 : i32 to index
    %c0_20 = arith.constant 0 : index
    %c0_21 = arith.constant 0 : index
    %42 = vector.load %arg7[%41, %c0_20, %c0_21] : memref<8x24x128xf32, #tpu.memory_space<vmem>>, vector<1x24x128xf32>
    %43 = vector.shape_cast %42 : vector<1x24x128xf32> to vector<24x128xf32>
    %cst_22 = arith.constant dense<0.000000e+00> : vector<24x128xf32>
    %44 = tpu.matmul %40, %1, %cst_22 {dimension_numbers = #tpu.dot_dimension_numbers<[1], [0], [0], [1], [0, 0, 1, 1], [], []>} : vector<24x32xbf16>, vector<32x128xbf16>, vector<24x128xf32> -> vector<24x128xf32>
    %45 = arith.addf %43, %44 : vector<24x128xf32>
    %46 = math.tanh %45 : vector<24x128xf32>
    %47 = arith.negf %45 : vector<24x128xf32>
    %48 = math.exp %47 : vector<24x128xf32>
    %cst_23 = arith.constant 1.000000e+00 : f32
    %49 = vector.broadcast %cst_23 : f32 to vector<24x128xf32>
    %50 = arith.addf %49, %48 : vector<24x128xf32>
    %51 = arith.divf %49, %50 : vector<24x128xf32>
    %52 = arith.select %16, %46, %51 : vector<24x128xi1>, vector<24x128xf32>
    %53 = vector.extract_strided_slice %52 {offsets = [0, 0], sizes = [24, 32], strides = [1, 1]} : vector<24x128xf32> to vector<24x32xf32>
    %54 = vector.extract_strided_slice %52 {offsets = [0, 32], sizes = [24, 32], strides = [1, 1]} : vector<24x128xf32> to vector<24x32xf32>
    %55 = vector.extract_strided_slice %52 {offsets = [0, 64], sizes = [24, 32], strides = [1, 1]} : vector<24x128xf32> to vector<24x32xf32>
    %56 = vector.extract_strided_slice %52 {offsets = [0, 96], sizes = [24, 32], strides = [1, 1]} : vector<24x128xf32> to vector<24x32xf32>
    %57 = arith.mulf %53, %55 : vector<24x32xf32>
    %58 = arith.mulf %56, %37 : vector<24x32xf32>
    %59 = arith.addf %57, %58 : vector<24x32xf32>
    %60 = math.tanh %59 : vector<24x32xf32>
    %61 = arith.mulf %54, %60 : vector<24x32xf32>
    %62 = arith.truncf %61 : vector<24x32xf32> to vector<24x32xbf16>
    %c2_i32 = arith.constant 2 : i32
    %63 = arith.index_cast %c2_i32 : i32 to index
    %c0_24 = arith.constant 0 : index
    %c0_25 = arith.constant 0 : index
    %64 = vector.load %arg7[%63, %c0_24, %c0_25] : memref<8x24x128xf32, #tpu.memory_space<vmem>>, vector<1x24x128xf32>
    %65 = vector.shape_cast %64 : vector<1x24x128xf32> to vector<24x128xf32>
    %cst_26 = arith.constant dense<0.000000e+00> : vector<24x128xf32>
    %66 = tpu.matmul %62, %1, %cst_26 {dimension_numbers = #tpu.dot_dimension_numbers<[1], [0], [0], [1], [0, 0, 1, 1], [], []>} : vector<24x32xbf16>, vector<32x128xbf16>, vector<24x128xf32> -> vector<24x128xf32>
    %67 = arith.addf %65, %66 : vector<24x128xf32>
    %68 = math.tanh %67 : vector<24x128xf32>
    %69 = arith.negf %67 : vector<24x128xf32>
    %70 = math.exp %69 : vector<24x128xf32>
    %cst_27 = arith.constant 1.000000e+00 : f32
    %71 = vector.broadcast %cst_27 : f32 to vector<24x128xf32>
    %72 = arith.addf %71, %70 : vector<24x128xf32>
    %73 = arith.divf %71, %72 : vector<24x128xf32>
    %74 = arith.select %16, %68, %73 : vector<24x128xi1>, vector<24x128xf32>
    %75 = vector.extract_strided_slice %74 {offsets = [0, 0], sizes = [24, 32], strides = [1, 1]} : vector<24x128xf32> to vector<24x32xf32>
    %76 = vector.extract_strided_slice %74 {offsets = [0, 32], sizes = [24, 32], strides = [1, 1]} : vector<24x128xf32> to vector<24x32xf32>
    %77 = vector.extract_strided_slice %74 {offsets = [0, 64], sizes = [24, 32], strides = [1, 1]} : vector<24x128xf32> to vector<24x32xf32>
    %78 = vector.extract_strided_slice %74 {offsets = [0, 96], sizes = [24, 32], strides = [1, 1]} : vector<24x128xf32> to vector<24x32xf32>
    %79 = arith.mulf %75, %77 : vector<24x32xf32>
    %80 = arith.mulf %78, %59 : vector<24x32xf32>
    %81 = arith.addf %79, %80 : vector<24x32xf32>
    %82 = math.tanh %81 : vector<24x32xf32>
    %83 = arith.mulf %76, %82 : vector<24x32xf32>
    %84 = arith.truncf %83 : vector<24x32xf32> to vector<24x32xbf16>
    %c3_i32 = arith.constant 3 : i32
    %85 = arith.index_cast %c3_i32 : i32 to index
    %c0_28 = arith.constant 0 : index
    %c0_29 = arith.constant 0 : index
    %86 = vector.load %arg7[%85, %c0_28, %c0_29] : memref<8x24x128xf32, #tpu.memory_space<vmem>>, vector<1x24x128xf32>
    %87 = vector.shape_cast %86 : vector<1x24x128xf32> to vector<24x128xf32>
    %cst_30 = arith.constant dense<0.000000e+00> : vector<24x128xf32>
    %88 = tpu.matmul %84, %1, %cst_30 {dimension_numbers = #tpu.dot_dimension_numbers<[1], [0], [0], [1], [0, 0, 1, 1], [], []>} : vector<24x32xbf16>, vector<32x128xbf16>, vector<24x128xf32> -> vector<24x128xf32>
    %89 = arith.addf %87, %88 : vector<24x128xf32>
    %90 = math.tanh %89 : vector<24x128xf32>
    %91 = arith.negf %89 : vector<24x128xf32>
    %92 = math.exp %91 : vector<24x128xf32>
    %cst_31 = arith.constant 1.000000e+00 : f32
    %93 = vector.broadcast %cst_31 : f32 to vector<24x128xf32>
    %94 = arith.addf %93, %92 : vector<24x128xf32>
    %95 = arith.divf %93, %94 : vector<24x128xf32>
    %96 = arith.select %16, %90, %95 : vector<24x128xi1>, vector<24x128xf32>
    %97 = vector.extract_strided_slice %96 {offsets = [0, 0], sizes = [24, 32], strides = [1, 1]} : vector<24x128xf32> to vector<24x32xf32>
    %98 = vector.extract_strided_slice %96 {offsets = [0, 32], sizes = [24, 32], strides = [1, 1]} : vector<24x128xf32> to vector<24x32xf32>
    %99 = vector.extract_strided_slice %96 {offsets = [0, 64], sizes = [24, 32], strides = [1, 1]} : vector<24x128xf32> to vector<24x32xf32>
    %100 = vector.extract_strided_slice %96 {offsets = [0, 96], sizes = [24, 32], strides = [1, 1]} : vector<24x128xf32> to vector<24x32xf32>
    %101 = arith.mulf %97, %99 : vector<24x32xf32>
    %102 = arith.mulf %100, %81 : vector<24x32xf32>
    %103 = arith.addf %101, %102 : vector<24x32xf32>
    %104 = math.tanh %103 : vector<24x32xf32>
    %105 = arith.mulf %98, %104 : vector<24x32xf32>
    %106 = arith.truncf %105 : vector<24x32xf32> to vector<24x32xbf16>
    %c4_i32 = arith.constant 4 : i32
    %107 = arith.index_cast %c4_i32 : i32 to index
    %c0_32 = arith.constant 0 : index
    %c0_33 = arith.constant 0 : index
    %108 = vector.load %arg7[%107, %c0_32, %c0_33] : memref<8x24x128xf32, #tpu.memory_space<vmem>>, vector<1x24x128xf32>
    %109 = vector.shape_cast %108 : vector<1x24x128xf32> to vector<24x128xf32>
    %cst_34 = arith.constant dense<0.000000e+00> : vector<24x128xf32>
    %110 = tpu.matmul %106, %1, %cst_34 {dimension_numbers = #tpu.dot_dimension_numbers<[1], [0], [0], [1], [0, 0, 1, 1], [], []>} : vector<24x32xbf16>, vector<32x128xbf16>, vector<24x128xf32> -> vector<24x128xf32>
    %111 = arith.addf %109, %110 : vector<24x128xf32>
    %112 = math.tanh %111 : vector<24x128xf32>
    %113 = arith.negf %111 : vector<24x128xf32>
    %114 = math.exp %113 : vector<24x128xf32>
    %cst_35 = arith.constant 1.000000e+00 : f32
    %115 = vector.broadcast %cst_35 : f32 to vector<24x128xf32>
    %116 = arith.addf %115, %114 : vector<24x128xf32>
    %117 = arith.divf %115, %116 : vector<24x128xf32>
    %118 = arith.select %16, %112, %117 : vector<24x128xi1>, vector<24x128xf32>
    %119 = vector.extract_strided_slice %118 {offsets = [0, 0], sizes = [24, 32], strides = [1, 1]} : vector<24x128xf32> to vector<24x32xf32>
    %120 = vector.extract_strided_slice %118 {offsets = [0, 32], sizes = [24, 32], strides = [1, 1]} : vector<24x128xf32> to vector<24x32xf32>
    %121 = vector.extract_strided_slice %118 {offsets = [0, 64], sizes = [24, 32], strides = [1, 1]} : vector<24x128xf32> to vector<24x32xf32>
    %122 = vector.extract_strided_slice %118 {offsets = [0, 96], sizes = [24, 32], strides = [1, 1]} : vector<24x128xf32> to vector<24x32xf32>
    %123 = arith.mulf %119, %121 : vector<24x32xf32>
    %124 = arith.mulf %122, %103 : vector<24x32xf32>
    %125 = arith.addf %123, %124 : vector<24x32xf32>
    %126 = math.tanh %125 : vector<24x32xf32>
    %127 = arith.mulf %120, %126 : vector<24x32xf32>
    %128 = arith.truncf %127 : vector<24x32xf32> to vector<24x32xbf16>
    %c5_i32 = arith.constant 5 : i32
    %129 = arith.index_cast %c5_i32 : i32 to index
    %c0_36 = arith.constant 0 : index
    %c0_37 = arith.constant 0 : index
    %130 = vector.load %arg7[%129, %c0_36, %c0_37] : memref<8x24x128xf32, #tpu.memory_space<vmem>>, vector<1x24x128xf32>
    %131 = vector.shape_cast %130 : vector<1x24x128xf32> to vector<24x128xf32>
    %cst_38 = arith.constant dense<0.000000e+00> : vector<24x128xf32>
    %132 = tpu.matmul %128, %1, %cst_38 {dimension_numbers = #tpu.dot_dimension_numbers<[1], [0], [0], [1], [0, 0, 1, 1], [], []>} : vector<24x32xbf16>, vector<32x128xbf16>, vector<24x128xf32> -> vector<24x128xf32>
    %133 = arith.addf %131, %132 : vector<24x128xf32>
    %134 = math.tanh %133 : vector<24x128xf32>
    %135 = arith.negf %133 : vector<24x128xf32>
    %136 = math.exp %135 : vector<24x128xf32>
    %cst_39 = arith.constant 1.000000e+00 : f32
    %137 = vector.broadcast %cst_39 : f32 to vector<24x128xf32>
    %138 = arith.addf %137, %136 : vector<24x128xf32>
    %139 = arith.divf %137, %138 : vector<24x128xf32>
    %140 = arith.select %16, %134, %139 : vector<24x128xi1>, vector<24x128xf32>
    %141 = vector.extract_strided_slice %140 {offsets = [0, 0], sizes = [24, 32], strides = [1, 1]} : vector<24x128xf32> to vector<24x32xf32>
    %142 = vector.extract_strided_slice %140 {offsets = [0, 32], sizes = [24, 32], strides = [1, 1]} : vector<24x128xf32> to vector<24x32xf32>
    %143 = vector.extract_strided_slice %140 {offsets = [0, 64], sizes = [24, 32], strides = [1, 1]} : vector<24x128xf32> to vector<24x32xf32>
    %144 = vector.extract_strided_slice %140 {offsets = [0, 96], sizes = [24, 32], strides = [1, 1]} : vector<24x128xf32> to vector<24x32xf32>
    %145 = arith.mulf %141, %143 : vector<24x32xf32>
    %146 = arith.mulf %144, %125 : vector<24x32xf32>
    %147 = arith.addf %145, %146 : vector<24x32xf32>
    %148 = math.tanh %147 : vector<24x32xf32>
    %149 = arith.mulf %142, %148 : vector<24x32xf32>
    %150 = arith.truncf %149 : vector<24x32xf32> to vector<24x32xbf16>
    %c6_i32 = arith.constant 6 : i32
    %151 = arith.index_cast %c6_i32 : i32 to index
    %c0_40 = arith.constant 0 : index
    %c0_41 = arith.constant 0 : index
    %152 = vector.load %arg7[%151, %c0_40, %c0_41] : memref<8x24x128xf32, #tpu.memory_space<vmem>>, vector<1x24x128xf32>
    %153 = vector.shape_cast %152 : vector<1x24x128xf32> to vector<24x128xf32>
    %cst_42 = arith.constant dense<0.000000e+00> : vector<24x128xf32>
    %154 = tpu.matmul %150, %1, %cst_42 {dimension_numbers = #tpu.dot_dimension_numbers<[1], [0], [0], [1], [0, 0, 1, 1], [], []>} : vector<24x32xbf16>, vector<32x128xbf16>, vector<24x128xf32> -> vector<24x128xf32>
    %155 = arith.addf %153, %154 : vector<24x128xf32>
    %156 = math.tanh %155 : vector<24x128xf32>
    %157 = arith.negf %155 : vector<24x128xf32>
    %158 = math.exp %157 : vector<24x128xf32>
    %cst_43 = arith.constant 1.000000e+00 : f32
    %159 = vector.broadcast %cst_43 : f32 to vector<24x128xf32>
    %160 = arith.addf %159, %158 : vector<24x128xf32>
    %161 = arith.divf %159, %160 : vector<24x128xf32>
    %162 = arith.select %16, %156, %161 : vector<24x128xi1>, vector<24x128xf32>
    %163 = vector.extract_strided_slice %162 {offsets = [0, 0], sizes = [24, 32], strides = [1, 1]} : vector<24x128xf32> to vector<24x32xf32>
    %164 = vector.extract_strided_slice %162 {offsets = [0, 32], sizes = [24, 32], strides = [1, 1]} : vector<24x128xf32> to vector<24x32xf32>
    %165 = vector.extract_strided_slice %162 {offsets = [0, 64], sizes = [24, 32], strides = [1, 1]} : vector<24x128xf32> to vector<24x32xf32>
    %166 = vector.extract_strided_slice %162 {offsets = [0, 96], sizes = [24, 32], strides = [1, 1]} : vector<24x128xf32> to vector<24x32xf32>
    %167 = arith.mulf %163, %165 : vector<24x32xf32>
    %168 = arith.mulf %166, %147 : vector<24x32xf32>
    %169 = arith.addf %167, %168 : vector<24x32xf32>
    %170 = math.tanh %169 : vector<24x32xf32>
    %171 = arith.mulf %164, %170 : vector<24x32xf32>
    %172 = arith.truncf %171 : vector<24x32xf32> to vector<24x32xbf16>
    %c7_i32 = arith.constant 7 : i32
    %173 = arith.index_cast %c7_i32 : i32 to index
    %c0_44 = arith.constant 0 : index
    %c0_45 = arith.constant 0 : index
    %174 = vector.load %arg7[%173, %c0_44, %c0_45] : memref<8x24x128xf32, #tpu.memory_space<vmem>>, vector<1x24x128xf32>
    %175 = vector.shape_cast %174 : vector<1x24x128xf32> to vector<24x128xf32>
    %cst_46 = arith.constant dense<0.000000e+00> : vector<24x128xf32>
    %176 = tpu.matmul %172, %1, %cst_46 {dimension_numbers = #tpu.dot_dimension_numbers<[1], [0], [0], [1], [0, 0, 1, 1], [], []>} : vector<24x32xbf16>, vector<32x128xbf16>, vector<24x128xf32> -> vector<24x128xf32>
    %177 = arith.addf %175, %176 : vector<24x128xf32>
    %178 = math.tanh %177 : vector<24x128xf32>
    %179 = arith.negf %177 : vector<24x128xf32>
    %180 = math.exp %179 : vector<24x128xf32>
    %cst_47 = arith.constant 1.000000e+00 : f32
    %181 = vector.broadcast %cst_47 : f32 to vector<24x128xf32>
    %182 = arith.addf %181, %180 : vector<24x128xf32>
    %183 = arith.divf %181, %182 : vector<24x128xf32>
    %184 = arith.select %16, %178, %183 : vector<24x128xi1>, vector<24x128xf32>
    %185 = vector.extract_strided_slice %184 {offsets = [0, 0], sizes = [24, 32], strides = [1, 1]} : vector<24x128xf32> to vector<24x32xf32>
    %186 = vector.extract_strided_slice %184 {offsets = [0, 32], sizes = [24, 32], strides = [1, 1]} : vector<24x128xf32> to vector<24x32xf32>
    %187 = vector.extract_strided_slice %184 {offsets = [0, 64], sizes = [24, 32], strides = [1, 1]} : vector<24x128xf32> to vector<24x32xf32>
    %188 = vector.extract_strided_slice %184 {offsets = [0, 96], sizes = [24, 32], strides = [1, 1]} : vector<24x128xf32> to vector<24x32xf32>
    %189 = arith.mulf %185, %187 : vector<24x32xf32>
    %190 = arith.mulf %188, %169 : vector<24x32xf32>
    %191 = arith.addf %189, %190 : vector<24x32xf32>
    %192 = math.tanh %191 : vector<24x32xf32>
    %193 = arith.mulf %186, %192 : vector<24x32xf32>
    %194 = arith.truncf %193 : vector<24x32xf32> to vector<24x32xbf16>
    %c8_i32 = arith.constant 8 : i32
    %195 = vector.extract_strided_slice %191 {offsets = [0, 0], sizes = [8, 32], strides = [1, 1]} : vector<24x32xf32> to vector<8x32xf32>
    %196 = vector.extract_strided_slice %191 {offsets = [8, 0], sizes = [8, 32], strides = [1, 1]} : vector<24x32xf32> to vector<8x32xf32>
    %197 = vector.extract_strided_slice %191 {offsets = [16, 0], sizes = [8, 32], strides = [1, 1]} : vector<24x32xf32> to vector<8x32xf32>
    %198 = arith.mulf %195, %196 : vector<8x32xf32>
    %cst_48 = arith.constant dense<0.000000e+00> : vector<8xf32>
    %199 = vector.multi_reduction <add>, %198, %cst_48 [1] : vector<8x32xf32> to vector<8xf32>
    %200 = vector.shape_cast %199 : vector<8xf32> to vector<8x1xf32>
    %201 = arith.mulf %195, %195 : vector<8x32xf32>
    %cst_49 = arith.constant dense<0.000000e+00> : vector<8xf32>
    %202 = vector.multi_reduction <add>, %201, %cst_49 [1] : vector<8x32xf32> to vector<8xf32>
    %203 = vector.shape_cast %202 : vector<8xf32> to vector<8x1xf32>
    %204 = math.sqrt %203 : vector<8x1xf32>
    %205 = arith.mulf %196, %196 : vector<8x32xf32>
    %cst_50 = arith.constant dense<0.000000e+00> : vector<8xf32>
    %206 = vector.multi_reduction <add>, %205, %cst_50 [1] : vector<8x32xf32> to vector<8xf32>
    %207 = vector.shape_cast %206 : vector<8xf32> to vector<8x1xf32>
    %208 = math.sqrt %207 : vector<8x1xf32>
    %209 = arith.mulf %204, %208 : vector<8x1xf32>
    %cst_51 = arith.constant 9.99999993E-9 : f32
    %210 = vector.broadcast %cst_51 : f32 to vector<8x1xf32>
    %211 = arith.maximumf %209, %210 : vector<8x1xf32>
    %212 = arith.divf %200, %211 : vector<8x1xf32>
    %213 = arith.mulf %195, %197 : vector<8x32xf32>
    %cst_52 = arith.constant dense<0.000000e+00> : vector<8xf32>
    %214 = vector.multi_reduction <add>, %213, %cst_52 [1] : vector<8x32xf32> to vector<8xf32>
    %215 = vector.shape_cast %214 : vector<8xf32> to vector<8x1xf32>
    %216 = arith.mulf %195, %195 : vector<8x32xf32>
    %cst_53 = arith.constant dense<0.000000e+00> : vector<8xf32>
    %217 = vector.multi_reduction <add>, %216, %cst_53 [1] : vector<8x32xf32> to vector<8xf32>
    %218 = vector.shape_cast %217 : vector<8xf32> to vector<8x1xf32>
    %219 = math.sqrt %218 : vector<8x1xf32>
    %220 = arith.mulf %197, %197 : vector<8x32xf32>
    %cst_54 = arith.constant dense<0.000000e+00> : vector<8xf32>
    %221 = vector.multi_reduction <add>, %220, %cst_54 [1] : vector<8x32xf32> to vector<8xf32>
    %222 = vector.shape_cast %221 : vector<8xf32> to vector<8x1xf32>
    %223 = math.sqrt %222 : vector<8x1xf32>
    %224 = arith.mulf %219, %223 : vector<8x1xf32>
    %cst_55 = arith.constant 9.99999993E-9 : f32
    %225 = vector.broadcast %cst_55 : f32 to vector<8x1xf32>
    %226 = arith.maximumf %224, %225 : vector<8x1xf32>
    %227 = arith.divf %215, %226 : vector<8x1xf32>
    %228 = vector.broadcast %3 : f32 to vector<8x1xf32>
    %229 = arith.subf %228, %212 : vector<8x1xf32>
    %230 = arith.addf %229, %227 : vector<8x1xf32>
    %cst_56 = arith.constant 0.000000e+00 : f32
    %231 = vector.broadcast %cst_56 : f32 to vector<8x1xf32>
    %232 = arith.maximumf %230, %231 : vector<8x1xf32>
    %233 = tpu.transpose %232, [1, 0] : vector<8x1xf32> -> vector<1x8xf32>
    %234 = vector.shape_cast %233 : vector<1x8xf32> to vector<1x1x8xf32>
    %c0_57 = arith.constant 0 : index
    %c0_58 = arith.constant 0 : index
    %c0_59 = arith.constant 0 : index
    %235 = vector.load %arg6[%c0_57, %c0_58, %c0_59] : memref<1x1x8xf32, #tpu.memory_space<vmem>>, vector<1x1x8xf32>
    tpu.vector_store %arg6[%c0_57, %c0_58, %c0_59], %234 {strides = array<i32>} : memref<1x1x8xf32, #tpu.memory_space<vmem>>, vector<1x1x8xf32>,
    return
  }
  func.func @transform_0(%arg0: i32) -> (i32, i32) {
    %c0_i32 = arith.constant 0 : i32
    %c0_i32_0 = arith.constant 0 : i32
    %c0_i32_1 = arith.constant 0 : i32
    return %c0_i32, %c0_i32_0 : i32, i32
  }
  func.func @transform_1(%arg0: i32) -> (i32, i32, i32, i32) {
    %c0_i32 = arith.constant 0 : i32
    %c0_i32_0 = arith.constant 0 : i32
    %c0_i32_1 = arith.constant 0 : i32
    %c0_i32_2 = arith.constant 0 : i32
    return %c0_i32, %c0_i32_0, %arg0, %c0_i32_1 : i32, i32, i32, i32
  }
  func.func @transform_2(%arg0: i32) -> (i32, i32) {
    %c0_i32 = arith.constant 0 : i32
    %c0_i32_0 = arith.constant 0 : i32
    %c0_i32_1 = arith.constant 0 : i32
    return %c0_i32, %c0_i32_0 : i32, i32
  }
  func.func @transform_3(%arg0: i32) -> (i32, i32) {
    %c0_i32 = arith.constant 0 : i32
    %c0_i32_0 = arith.constant 0 : i32
    %c0_i32_1 = arith.constant 0 : i32
    return %c0_i32, %c0_i32_0 : i32, i32
  }
  func.func @transform_4(%arg0: i32) -> (i32, i32) {
    %c0_i32 = arith.constant 0 : i32
    %c0_i32_0 = arith.constant 0 : i32
    %c0_i32_1 = arith.constant 0 : i32
    return %c0_i32, %c0_i32_0 : i32, i32
  }
  func.func @transform_5(%arg0: i32) -> (i32, i32, i32) {
    %c0_i32 = arith.constant 0 : i32
    %c0_i32_0 = arith.constant 0 : i32
    %c0_i32_1 = arith.constant 0 : i32
    return %arg0, %c0_i32, %c0_i32_0 : i32, i32, i32
  }
}

</mosaic_0001>

<llo_original>
// kernel: tpu_custom_call.1
$region0: #{tpu_custom_call.1}
  #allocation0 [shape = 'u32[]', space=smem, size = 0x4, offset = 0x4, fixed_abs, tag = 'smem constant byte address 0x4 - core index']
  #allocation1 [shape = 'u32[144,128]{1,0:T(1,128)}', space=vmem, size = 0x12000, scoped, tag = 'internal scratch']
  #allocation2 [shape = 'f32[8,24,128]{2,1,0:T(8,128)}', space=vmem, size = 0x18000, scoped, tag = 'scratch operand']
  #allocation3 [shape = 'f32[1,1]{1,0:T(1,128)S(6)}', space=smem, size = 0x200, scoped, tag = 'scoped memory for tpu_custom_call.1']
  %s0 = inlined_call_operand.<no memory space> [shape: f32[1,1], index: 0, kind: input, shape index: {}]
  %s1 = inlined_call_operand.hbm [shape: bf16[8,3,8,32], index: 1, kind: input, shape index: {}]
  %s2 = inlined_call_operand.hbm [shape: bf16[32,128], index: 2, kind: input, shape index: {}]
  %s3 = inlined_call_operand.hbm [shape: bf16[32,128], index: 3, kind: input, shape index: {}]
  %s4 = inlined_call_operand.vmem [shape: f32[1,128], index: 4, kind: input, shape index: {}]
  %s5 = inlined_call_operand.hbm [shape: f32[1,1,8], index: 5, kind: output, shape index: {}]
  %s6 = sld [smem:[#allocation0]]
  $region42: #{tpu_custom_call.1} parent=0
    _
  %s8 = ssub.s32 1, %s6
  %s9 = scalar_select 0, %s8, %s6
  %10 = sst [smem:[#allocation3]] %s0
  $region1: #{tpu_custom_call.1} parent=0
    #allocation4 [shape = 'u8[49152]{0}', space=vmem, size = 0xc000, scoped, tag = 'input window, operand 1, single buffered']
    #allocation5 [shape = 's32[1]{0}', space=sflag, size = 0x4, scoped, tag = 'scoped memory for tpu_custom_call.1']
    #allocation6 [shape = 's32[1]{0}', space=sflag, size = 0x4, scoped, tag = 'scoped memory for tpu_custom_call.1']
    #allocation7 [shape = 'u8[8192]{0}', space=vmem, size = 0x2000, scoped, tag = 'input window, operand 2, single buffered']
    #allocation8 [shape = 's32[1]{0}', space=sflag, size = 0x4, scoped, tag = 'scoped memory for tpu_custom_call.1']
    #allocation9 [shape = 'u8[8192]{0}', space=vmem, size = 0x2000, scoped, tag = 'input window, operand 3, single buffered']
    #allocation10 [shape = 'u8[512]{0}', space=vmem, size = 0x400, scoped, tag = 'output window, operand 0, single buffered']
    %11 = vsyncpa [#allocation5], 0
    %12 = vsyncpa [#allocation8], 0
    %13 = vsyncpa [#allocation6], 0
    // Predicated region
    $region2: #{tpu_custom_call.1} parent=1 // pred_check
      _
    $region3: #{tpu_custom_call.1} parent=1 // pred_check_branch
      %15 = sbr.rel (0) target = $region5
    $region4: #{tpu_custom_call.1} parent=1 // pred_region
      _
    $region5: #{tpu_custom_call.1} parent=1 // pred_fallthru
      _
    // Predicated region
    $region6: #{tpu_custom_call.1} parent=1 // pred_check
      _
    $region7: #{tpu_custom_call.1} parent=1 // pred_check_branch
      %17 = sbr.rel (0) target = $region9
    $region8: #{tpu_custom_call.1} parent=1 // pred_region
      %s19 = ssub.s32 1536, 1536
      %20 = vsyncadd [#allocation5], %s19
      %s21 = sshll.u32 [#allocation4], 4
      %s22 = int_to_ptr.vmem [resolvable:$true] %s21
      %27 = dma.hbm_to_vmem [thread:$0]  %s1, 1536, %s22, [#allocation5], 64, 64, 4
    $region9: #{tpu_custom_call.1} parent=1 // pred_fallthru
      _
    // Predicated region
    $region10: #{tpu_custom_call.1} parent=1 // pred_check
      _
    $region11: #{tpu_custom_call.1} parent=1 // pred_check_branch
      %29 = sbr.rel (0) target = $region13
    $region12: #{tpu_custom_call.1} parent=1 // pred_region
      %s31 = ssub.s32 256, 256
      %32 = vsyncadd [#allocation8], %s31
      %s33 = sshll.u32 [#allocation7], 4
      %s34 = int_to_ptr.vmem [resolvable:$true] %s33
      %39 = dma.hbm_to_vmem [thread:$0]  %s2, 256, %s34, [#allocation8], 64, 64, 4
    $region13: #{tpu_custom_call.1} parent=1 // pred_fallthru
      _
    // Predicated region
    $region14: #{tpu_custom_call.1} parent=1 // pred_check
      _
    $region15: #{tpu_custom_call.1} parent=1 // pred_check_branch
      %41 = sbr.rel (0) target = $region17
    $region16: #{tpu_custom_call.1} parent=1 // pred_region
      %s43 = ssub.s32 256, 256
      %44 = vsyncadd [#allocation8], %s43
      %s45 = sshll.u32 [#allocation9], 4
      %s46 = int_to_ptr.vmem [resolvable:$true] %s45
      %51 = dma.hbm_to_vmem [thread:$0]  %s3, 256, %s46, [#allocation8], 64, 64, 4
    $region17: #{tpu_custom_call.1} parent=1 // pred_fallthru
      _
    // Predicated region
    $region18: #{tpu_custom_call.1} parent=1 // pred_check
      _
    $region19: #{tpu_custom_call.1} parent=1 // pred_check_branch
      %53 = sbr.rel (0) target = $region21
    $region20: #{tpu_custom_call.1} parent=1 // pred_region
      _
    $region21: #{tpu_custom_call.1} parent=1 // pred_fallthru
      _
    // Predicated region
    $region22: #{tpu_custom_call.1} parent=1 // pred_check
      _
    $region23: #{tpu_custom_call.1} parent=1 // pred_check_branch
      %55 = sbr.rel (0) target = $region25
    $region24: #{tpu_custom_call.1} parent=1 // pred_region
      %56 = dma.done [#allocation5], 1536
    $region25: #{tpu_custom_call.1} parent=1 // pred_fallthru
      _
    // Predicated region
    $region26: #{tpu_custom_call.1} parent=1 // pred_check
      _
    $region27: #{tpu_custom_call.1} parent=1 // pred_check_branch
      %58 = sbr.rel (0) target = $region29
    $region28: #{tpu_custom_call.1} parent=1 // pred_region
      %59 = dma.done [#allocation8], 256
    $region29: #{tpu_custom_call.1} parent=1 // pred_fallthru
      _
    // Predicated region
    $region30: #{tpu_custom_call.1} parent=1 // pred_check
      _
    $region31: #{tpu_custom_call.1} parent=1 // pred_check_branch
      %61 = sbr.rel (0) target = $region33
    $region32: #{tpu_custom_call.1} parent=1 // pred_region
      %62 = dma.done [#allocation8], 256
    $region33: #{tpu_custom_call.1} parent=1 // pred_fallthru
      _
    %v64 = vld [vmem:[#allocation7] sm:$0xf]
    %v65 = vld [vmem:[#allocation7 + $0x4] sm:$0xf]
    %v66 = vld [vmem:[#allocation7 + $0x8] sm:$0xf]
    %v67 = vld [vmem:[#allocation7 + $0xc] sm:$0xf]
    %v68 = vld [vmem:[#allocation9] sm:$0xf]
    %v69 = vld [vmem:[#allocation9 + $0x4] sm:$0xf]
    %v70 = vld [vmem:[#allocation9 + $0x8] sm:$0xf]
    %v71 = vld [vmem:[#allocation9 + $0xc] sm:$0xf]
    %v72 = vld [vmem:[%s4] sm:$0x1]
    %s73 = sld [smem:[#allocation3]]
    %v74 = vld [vmem:[#allocation4] sm:$0xf]
    %v75 = vld [vmem:[#allocation4 + $0x4] sm:$0xf]
    %v76 = vld [vmem:[#allocation4 + $0x8] sm:$0xf]
    %v77 = vld [vmem:[#allocation4 + $0xc] sm:$0xf]
    %v78 = vld [vmem:[#allocation4 + $0x10] sm:$0xf]
    %v79 = vld [vmem:[#allocation4 + $0x14] sm:$0xf]
    %v80 = vld [vmem:[#allocation4 + $0x18] sm:$0xf]
    %v81 = vld [vmem:[#allocation4 + $0x1c] sm:$0xf]
    %v82 = vld [vmem:[#allocation4 + $0x20] sm:$0xf]
    %v83 = vld [vmem:[#allocation4 + $0x24] sm:$0xf]
    %v84 = vld [vmem:[#allocation4 + $0x28] sm:$0xf]
    %v85 = vld [vmem:[#allocation4 + $0x2c] sm:$0xf]
    %v86 = vld [vmem:[#allocation4 + $0x30] sm:$0xf]
    %v87 = vld [vmem:[#allocation4 + $0x34] sm:$0xf]
    %v88 = vld [vmem:[#allocation4 + $0x38] sm:$0xf]
    %v89 = vld [vmem:[#allocation4 + $0x3c] sm:$0xf]
    %v90 = vld [vmem:[#allocation4 + $0x40] sm:$0xf]
    %v91 = vld [vmem:[#allocation4 + $0x44] sm:$0xf]
    %v92 = vld [vmem:[#allocation4 + $0x48] sm:$0xf]
    %v93 = vld [vmem:[#allocation4 + $0x4c] sm:$0xf]
    %v94 = vld [vmem:[#allocation4 + $0x50] sm:$0xf]
    %v95 = vld [vmem:[#allocation4 + $0x54] sm:$0xf]
    %v96 = vld [vmem:[#allocation4 + $0x58] sm:$0xf]
    %v97 = vld [vmem:[#allocation4 + $0x5c] sm:$0xf]
    %v99 = vlaneseq
    %v100 = vshrl.u32 %v99, 7
    %v101 = vsub.s32 0, %v100
    %v102 = vrot.slane %v72, %v101
    %v128 = vunpack.c.l.b16 %v74
    %v129 = vunpack.c.l.b16 %v75
    %v130 = vunpack.c.l.b16 %v76
    %v131 = vunpack.c.l.b16 %v77
    %v132 = vunpack.c.l.b16 %v78
    %v133 = vunpack.c.l.b16 %v79
    %v134 = vunpack.c.l.b16 %v80
    %v135 = vunpack.c.l.b16 %v81
    %v136 = vunpack.c.l.b16 %v82
    %v137 = vunpack.c.l.b16 %v83
    %v138 = vunpack.c.l.b16 %v84
    %v139 = vunpack.c.l.b16 %v85
    %v140 = vunpack.c.l.b16 %v86
    %v141 = vunpack.c.l.b16 %v87
    %v142 = vunpack.c.l.b16 %v88
    %v143 = vunpack.c.l.b16 %v89
    %v144 = vunpack.c.l.b16 %v90
    %v145 = vunpack.c.l.b16 %v91
    %v146 = vunpack.c.l.b16 %v92
    %v147 = vunpack.c.l.b16 %v93
    %v148 = vunpack.c.l.b16 %v94
    %v149 = vunpack.c.l.b16 %v95
    %v150 = vunpack.c.l.b16 %v96
    %v151 = vunpack.c.l.b16 %v97
    %v152 = vpack.c.b16 %v129, %v128
    %v153 = vpack.c.b16 %v131, %v130
    %v154 = vpack.c.b16 %v133, %v132
    %v155 = vpack.c.b16 %v135, %v134
    %v156 = vpack.c.b16 %v137, %v136
    %v157 = vpack.c.b16 %v139, %v138
    %v158 = vpack.c.b16 %v141, %v140
    %v159 = vpack.c.b16 %v143, %v142
    %v160 = vpack.c.b16 %v145, %v144
    %v161 = vpack.c.b16 %v147, %v146
    %v162 = vpack.c.b16 %v149, %v148
    %v163 = vpack.c.b16 %v151, %v150
    %v168 = vunpack.c.l.b16 %v64
    %v169 = vunpack.c.l.b16 %v65
    %v170 = vunpack.c.l.b16 %v66
    %v171 = vunpack.c.l.b16 %v67
    %v172 = vpack.c.b16 %v169, %v168
    %v173 = vpack.c.b16 %v171, %v170
    %vm176 = vcmask 261120
    %v178 = vsel %vm176, %v152, 0
    %v181 = vsel %vm176, %v153, 0
    %v184 = vsel %vm176, %v154, 0
    %v187 = vsel %vm176, %v155, 0
    %v190 = vsel %vm176, %v156, 0
    %v193 = vsel %vm176, %v157, 0
    %v196 = vsel %vm176, %v158, 0
    %v199 = vsel %vm176, %v159, 0
    %v202 = vsel %vm176, %v160, 0
    %v205 = vsel %vm176, %v161, 0
    %v208 = vsel %vm176, %v162, 0
    %v211 = vsel %vm176, %v163, 0
    %213 = vmatprep.subr.bf16.mxu0 0
    %214 = vmatpush1.bf16.msra.mxu0 0
    %215 = vmatprep.subr.bf16.mxu0 0
    %216 = vmatpush1.bf16.msra.mxu0 0
    %217 = vmatprep.subr.bf16.mxu0 0
    %218 = vmatpush1.bf16.msra.mxu0 0
    %219 = vmatprep.subr.bf16.mxu0 0
    %220 = vmatpush1.bf16.msra.mxu0 0
    %221 = vmatprep.subr.bf16.mxu0 0
    %222 = vmatpush1.bf16.msra.mxu0 0
    %223 = vmatprep.subr.bf16.mxu0 0
    %224 = vmatpush1.bf16.msra.mxu0 0
    %225 = vmatprep.subr.bf16.mxu0 0
    %226 = vmatpush1.bf16.msra.mxu0 %v173
    %227 = vmatprep.subr.bf16.mxu0 0
    %228 = vmatpush1.bf16.msra.mxu0 %v172
    %229 = vmatprep.subr.bf16.mxu0 0
    %230 = vmatpush2.bf16.msra.mxu0 0
    %231 = vmatprep.subr.bf16.mxu0 0
    %232 = vmatpush2.bf16.msra.mxu0 0
    %233 = vmatprep.subr.bf16.mxu0 0
    %234 = vmatpush2.bf16.msra.mxu0 0
    %235 = vmatprep.subr.bf16.mxu0 0
    %236 = vmatpush2.bf16.msra.mxu0 0
    %237 = vmatprep.subr.bf16.mxu0 0
    %238 = vmatpush2.bf16.msra.mxu0 0
    %239 = vmatprep.subr.bf16.mxu0 0
    %240 = vmatpush2.bf16.msra.mxu0 0
    %241 = vmatprep.subr.bf16.mxu0 0
    %242 = vmatpush2.bf16.msra.mxu0 0
    %243 = vmatprep.subr.bf16.mxu0 0
    %244 = vmatpush2.bf16.msra.mxu0 0
    %245 = vmatprep.mubr.bf16.mxu0 0
    %246 = vmatmul.mubr.bf16.gmra.mxu0 %v178
    %v247 = vpop.f32.mrf.mxu0
    %v248 = vadd.f32 %v102, %v247
    %v249 = vpop.f32.mrf.mxu0
    %v250 = vpop.f32.mrf.mxu0
    %v251 = vadd.f32 %v102, %v250
    %v252 = vpop.f32.mrf.mxu0
    %253 = vmatprep.mubr.bf16.mxu0 0
    %254 = vmatmul.mubr.bf16.gmra.mxu0 %v181
    %v255 = vpop.f32.mrf.mxu0
    %v256 = vadd.f32 %v102, %v255
    %v257 = vpop.f32.mrf.mxu0
    %v258 = vpop.f32.mrf.mxu0
    %v259 = vadd.f32 %v102, %v258
    %v260 = vpop.f32.mrf.mxu0
    %261 = vmatprep.mubr.bf16.mxu0 0
    %262 = vmatmul.mubr.bf16.gmra.mxu0 %v184
    %v263 = vpop.f32.mrf.mxu0
    %v264 = vadd.f32 %v102, %v263
    %v265 = vpop.f32.mrf.mxu0
    %v266 = vpop.f32.mrf.mxu0
    %v267 = vadd.f32 %v102, %v266
    %v268 = vpop.f32.mrf.mxu0
    %269 = vmatprep.mubr.bf16.mxu0 0
    %270 = vmatmul.mubr.bf16.gmra.mxu0 %v187
    %v271 = vpop.f32.mrf.mxu0
    %v272 = vadd.f32 %v102, %v271
    %v273 = vpop.f32.mrf.mxu0
    %v274 = vpop.f32.mrf.mxu0
    %v275 = vadd.f32 %v102, %v274
    %v276 = vpop.f32.mrf.mxu0
    %277 = vmatprep.mubr.bf16.mxu0 0
    %278 = vmatmul.mubr.bf16.gmra.mxu0 %v190
    %v279 = vpop.f32.mrf.mxu0
    %v280 = vadd.f32 %v102, %v279
    %v281 = vpop.f32.mrf.mxu0
    %v282 = vpop.f32.mrf.mxu0
    %v283 = vadd.f32 %v102, %v282
    %v284 = vpop.f32.mrf.mxu0
    %285 = vmatprep.mubr.bf16.mxu0 0
    %286 = vmatmul.mubr.bf16.gmra.mxu0 %v193
    %v287 = vpop.f32.mrf.mxu0
    %v288 = vadd.f32 %v102, %v287
    %v289 = vpop.f32.mrf.mxu0
    %v290 = vpop.f32.mrf.mxu0
    %v291 = vadd.f32 %v102, %v290
    %v292 = vpop.f32.mrf.mxu0
    %293 = vmatprep.mubr.bf16.mxu0 0
    %294 = vmatmul.mubr.bf16.gmra.mxu0 %v196
    %v295 = vpop.f32.mrf.mxu0
    %v296 = vadd.f32 %v102, %v295
    %v297 = vpop.f32.mrf.mxu0
    %v298 = vpop.f32.mrf.mxu0
    %v299 = vadd.f32 %v102, %v298
    %v300 = vpop.f32.mrf.mxu0
    %301 = vmatprep.mubr.bf16.mxu0 0
    %302 = vmatmul.mubr.bf16.gmra.mxu0 %v199
    %v303 = vpop.f32.mrf.mxu0
    %v304 = vadd.f32 %v102, %v303
    %v305 = vpop.f32.mrf.mxu0
    %v306 = vpop.f32.mrf.mxu0
    %v307 = vadd.f32 %v102, %v306
    %v308 = vpop.f32.mrf.mxu0
    %309 = vmatprep.mubr.bf16.mxu0 0
    %310 = vmatmul.mubr.bf16.gmra.mxu0 %v202
    %v311 = vpop.f32.mrf.mxu0
    %v312 = vadd.f32 %v102, %v311
    %v313 = vpop.f32.mrf.mxu0
    %v314 = vpop.f32.mrf.mxu0
    %v315 = vadd.f32 %v102, %v314
    %v316 = vpop.f32.mrf.mxu0
    %317 = vmatprep.mubr.bf16.mxu0 0
    %318 = vmatmul.mubr.bf16.gmra.mxu0 %v205
    %v319 = vpop.f32.mrf.mxu0
    %v320 = vadd.f32 %v102, %v319
    %v321 = vpop.f32.mrf.mxu0
    %v322 = vpop.f32.mrf.mxu0
    %v323 = vadd.f32 %v102, %v322
    %v324 = vpop.f32.mrf.mxu0
    %325 = vmatprep.mubr.bf16.mxu0 0
    %326 = vmatmul.mubr.bf16.gmra.mxu0 %v208
    %v327 = vpop.f32.mrf.mxu0
    %v328 = vadd.f32 %v102, %v327
    %v329 = vpop.f32.mrf.mxu0
    %v330 = vpop.f32.mrf.mxu0
    %v331 = vadd.f32 %v102, %v330
    %v332 = vpop.f32.mrf.mxu0
    %333 = vmatprep.mubr.bf16.mxu0 0
    %334 = vmatmul.mubr.bf16.gmra.mxu0 %v211
    %v335 = vpop.f32.mrf.mxu0
    %v336 = vadd.f32 %v102, %v335
    %v337 = vpop.f32.mrf.mxu0
    %v338 = vpop.f32.mrf.mxu0
    %v339 = vadd.f32 %v102, %v338
    %v340 = vpop.f32.mrf.mxu0
    %341 = vdwg.mxu0
    %342 = vst [vmem:[#allocation2] sm:$0xff] %v248
    %343 = vst [vmem:[#allocation2 + $0x8] sm:$0xff] %v251
    %344 = vst [vmem:[#allocation2 + $0x10] sm:$0xff] %v256
    %345 = vst [vmem:[#allocation2 + $0x18] sm:$0xff] %v259
    %346 = vst [vmem:[#allocation2 + $0x20] sm:$0xff] %v264
    %347 = vst [vmem:[#allocation2 + $0x28] sm:$0xff] %v267
    %348 = vst [vmem:[#allocation2 + $0x30] sm:$0xff] %v272
    %349 = vst [vmem:[#allocation2 + $0x38] sm:$0xff] %v275
    %350 = vst [vmem:[#allocation2 + $0x40] sm:$0xff] %v280
    %351 = vst [vmem:[#allocation2 + $0x48] sm:$0xff] %v283
    %352 = vst [vmem:[#allocation2 + $0x50] sm:$0xff] %v288
    %353 = vst [vmem:[#allocation2 + $0x58] sm:$0xff] %v291
    %354 = vst [vmem:[#allocation2 + $0x60] sm:$0xff] %v296
    %355 = vst [vmem:[#allocation2 + $0x68] sm:$0xff] %v299
    %356 = vst [vmem:[#allocation2 + $0x70] sm:$0xff] %v304
    %357 = vst [vmem:[#allocation2 + $0x78] sm:$0xff] %v307
    %358 = vst [vmem:[#allocation2 + $0x80] sm:$0xff] %v312
    %359 = vst [vmem:[#allocation2 + $0x88] sm:$0xff] %v315
    %360 = vst [vmem:[#allocation2 + $0x90] sm:$0xff] %v320
    %361 = vst [vmem:[#allocation2 + $0x98] sm:$0xff] %v323
    %362 = vst [vmem:[#allocation2 + $0xa0] sm:$0xff] %v328
    %363 = vst [vmem:[#allocation2 + $0xa8] sm:$0xff] %v331
    %364 = vst [vmem:[#allocation2 + $0xb0] sm:$0xff] %v336
    %365 = vst [vmem:[#allocation2 + $0xb8] sm:$0xff] %v339
    %v366 = vlaneseq
    %v367 = vand.u32 %v366, 127
    %vm368 = vcmp.ge.s32.totalorder %v367, 64
    %vm369 = vcmp.lt.s32.totalorder %v367, 96
    %vm370 = vmand %vm368, %vm369
    %v371 = vld [vmem:[#allocation2] sm:$0xff]
    %v372 = vld [vmem:[#allocation2 + $0x8] sm:$0xff]
    %v373 = vld [vmem:[#allocation2 + $0x10] sm:$0xff]
    %v378 = vunpack.c.l.b16 %v68
    %v379 = vunpack.c.l.b16 %v69
    %v380 = vunpack.c.l.b16 %v70
    %v381 = vunpack.c.l.b16 %v71
    %v382 = vpack.c.b16 %v379, %v378
    %v383 = vpack.c.b16 %v381, %v380
    %v387 = vsel %vm176, 0, 0
    %389 = vmatprep.subr.bf16.mxu0 0
    %390 = vmatpush1.bf16.msra.mxu0 0
    %391 = vmatprep.subr.bf16.mxu0 0
    %392 = vmatpush1.bf16.msra.mxu0 0
    %393 = vmatprep.subr.bf16.mxu0 0
    %394 = vmatpush1.bf16.msra.mxu0 0
    %395 = vmatprep.subr.bf16.mxu0 0
    %396 = vmatpush1.bf16.msra.mxu0 0
    %397 = vmatprep.subr.bf16.mxu0 0
    %398 = vmatpush1.bf16.msra.mxu0 0
    %399 = vmatprep.subr.bf16.mxu0 0
    %400 = vmatpush1.bf16.msra.mxu0 0
    %401 = vmatprep.subr.bf16.mxu0 0
    %402 = vmatpush1.bf16.msra.mxu0 %v383
    %403 = vmatprep.subr.bf16.mxu0 0
    %404 = vmatpush1.bf16.msra.mxu0 %v382
    %405 = vmatprep.subr.bf16.mxu0 0
    %406 = vmatpush2.bf16.msra.mxu0 0
    %407 = vmatprep.subr.bf16.mxu0 0
    %408 = vmatpush2.bf16.msra.mxu0 0
    %409 = vmatprep.subr.bf16.mxu0 0
    %410 = vmatpush2.bf16.msra.mxu0 0
    %411 = vmatprep.subr.bf16.mxu0 0
    %412 = vmatpush2.bf16.msra.mxu0 0
    %413 = vmatprep.subr.bf16.mxu0 0
    %414 = vmatpush2.bf16.msra.mxu0 0
    %415 = vmatprep.subr.bf16.mxu0 0
    %416 = vmatpush2.bf16.msra.mxu0 0
    %417 = vmatprep.subr.bf16.mxu0 0
    %418 = vmatpush2.bf16.msra.mxu0 0
    %419 = vmatprep.subr.bf16.mxu0 0
    %420 = vmatpush2.bf16.msra.mxu0 0
    %421 = vmatprep.mubr.bf16.mxu0 0
    %422 = vmatmul.mubr.bf16.gmra.mxu0 %v387
    %v423 = vpop.f32.mrf.mxu0
    %v424 = vadd.f32 0.0, %v423
    %v425 = vpop.f32.mrf.mxu0
    %v426 = vpop.f32.mrf.mxu0
    %v427 = vadd.f32 0.0, %v426
    %v428 = vpop.f32.mrf.mxu0
    %429 = vmatprep.mubr.bf16.mxu0 0
    %430 = vmatmul.mubr.bf16.gmra.mxu0 %v387
    %v431 = vpop.f32.mrf.mxu0
    %v432 = vadd.f32 0.0, %v431
    %v433 = vpop.f32.mrf.mxu0
    %v434 = vpop.f32.mrf.mxu0
    %v435 = vpop.f32.mrf.mxu0
    %436 = vdwg.mxu0
    %v437 = vadd.f32 %v371, %v424
    %v438 = vadd.f32 %v372, %v427
    %v439 = vadd.f32 %v373, %v432
    %v440 = vtanh.pop %v437
    %v441 = vtanh.pop %v438
    %v442 = vtanh.pop %v439
    %v443 = vxor.u32 %v437, 2147483648
    %v444 = vxor.u32 %v438, 2147483648
    %v445 = vxor.u32 %v439, 2147483648
    %v446 = vmul.f32 %v443, 1.442695
    %v447 = vpow.pop %v446
    %v448 = vmul.f32 %v444, 1.442695
    %v449 = vpow.pop %v448
    %v450 = vmul.f32 %v445, 1.442695
    %v451 = vpow.pop %v450
    %v452 = vadd.f32 %v447, 1.0
    %v453 = vadd.f32 %v449, 1.0
    %v454 = vadd.f32 %v451, 1.0
    %v455 = vrcp.pop %v452
    %v456 = vmul.f32 1.0, %v455
    %v457 = vrcp.pop %v453
    %v458 = vmul.f32 1.0, %v457
    %v459 = vrcp.pop %v454
    %v460 = vmul.f32 1.0, %v459
    %v461 = vsel %vm370, %v440, %v456
    %v462 = vsel %vm370, %v441, %v458
    %v463 = vsel %vm370, %v442, %v460
    %467 = vrot.lane.b32.xlu0 %v461, 64
    %v468 = vpop.permute.xlu0 %467
    %469 = vrot.lane.b32.xlu0 %v462, 64
    %v470 = vpop.permute.xlu0 %469
    %471 = vrot.lane.b32.xlu0 %v463, 64
    %v472 = vpop.permute.xlu0 %471
    %v476 = vmul.f32 %v461, %v468
    %v477 = vmul.f32 %v462, %v470
    %v478 = vmul.f32 %v463, %v472
    %v479 = vmul.f32 %v461, 0.0
    %v480 = vmul.f32 %v462, 0.0
    %v481 = vmul.f32 %v463, 0.0
    %485 = vrot.lane.b32.xlu0 %v479, 32
    %v486 = vpop.permute.xlu0 %485
    %487 = vrot.lane.b32.xlu0 %v480, 32
    %v488 = vpop.permute.xlu0 %487
    %489 = vrot.lane.b32.xlu0 %v481, 32
    %v490 = vpop.permute.xlu0 %489
    %v494 = vadd.f32 %v476, %v486
    %v495 = vadd.f32 %v477, %v488
    %v496 = vadd.f32 %v478, %v490
    %v497 = vtanh.pop %v494
    %v498 = vtanh.pop %v495
    %v499 = vtanh.pop %v496
    %503 = vrot.lane.b32.xlu0 %v497, 32
    %v504 = vpop.permute.xlu0 %503
    %505 = vrot.lane.b32.xlu0 %v498, 32
    %v506 = vpop.permute.xlu0 %505
    %507 = vrot.lane.b32.xlu0 %v499, 32
    %v508 = vpop.permute.xlu0 %507
    %v512 = vmul.f32 %v461, %v504
    %v513 = vmul.f32 %v462, %v506
    %v514 = vmul.f32 %v463, %v508
    %v515 = vpack.c.bf16 %v513, %v512
    %v516 = vpack.c.bf16 %v514, %v514
    %s517 = scalar_lea.vmem [#allocation2], 24
    %v518 = vld [vmem:[%s517] sm:$0xff]
    %v519 = vld [vmem:[%s517 + $0x8] sm:$0xff]
    %v520 = vld [vmem:[%s517 + $0x10] sm:$0xff]
    %523 = vrot.lane.b32.xlu0 %v515, 96
    %v524 = vpop.permute.xlu0 %523
    %525 = vrot.lane.b32.xlu0 %v516, 96
    %v526 = vpop.permute.xlu0 %525
    %v528 = vsel %vm176, %v524, 0
    %v531 = vsel %vm176, %v526, 0
    %533 = vmatprep.subr.bf16.mxu0 0
    %534 = vmatpush1.bf16.msra.mxu0 0
    %535 = vmatprep.subr.bf16.mxu0 0
    %536 = vmatpush1.bf16.msra.mxu0 0
    %537 = vmatprep.subr.bf16.mxu0 0
    %538 = vmatpush1.bf16.msra.mxu0 0
    %539 = vmatprep.subr.bf16.mxu0 0
    %540 = vmatpush1.bf16.msra.mxu0 0
    %541 = vmatprep.subr.bf16.mxu0 0
    %542 = vmatpush1.bf16.msra.mxu0 0
    %543 = vmatprep.subr.bf16.mxu0 0
    %544 = vmatpush1.bf16.msra.mxu0 0
    %545 = vmatprep.subr.bf16.mxu0 0
    %546 = vmatpush1.bf16.msra.mxu0 %v383
    %547 = vmatprep.subr.bf16.mxu0 0
    %548 = vmatpush1.bf16.msra.mxu0 %v382
    %549 = vmatprep.subr.bf16.mxu0 0
    %550 = vmatpush2.bf16.msra.mxu0 0
    %551 = vmatprep.subr.bf16.mxu0 0
    %552 = vmatpush2.bf16.msra.mxu0 0
    %553 = vmatprep.subr.bf16.mxu0 0
    %554 = vmatpush2.bf16.msra.mxu0 0
    %555 = vmatprep.subr.bf16.mxu0 0
    %556 = vmatpush2.bf16.msra.mxu0 0
    %557 = vmatprep.subr.bf16.mxu0 0
    %558 = vmatpush2.bf16.msra.mxu0 0
    %559 = vmatprep.subr.bf16.mxu0 0
    %560 = vmatpush2.bf16.msra.mxu0 0
    %561 = vmatprep.subr.bf16.mxu0 0
    %562 = vmatpush2.bf16.msra.mxu0 0
    %563 = vmatprep.subr.bf16.mxu0 0
    %564 = vmatpush2.bf16.msra.mxu0 0
    %565 = vmatprep.mubr.bf16.mxu0 0
    %566 = vmatmul.mubr.bf16.gmra.mxu0 %v528
    %v567 = vpop.f32.mrf.mxu0
    %v568 = vadd.f32 0.0, %v567
    %v569 = vpop.f32.mrf.mxu0
    %v570 = vpop.f32.mrf.mxu0
    %v571 = vadd.f32 0.0, %v570
    %v572 = vpop.f32.mrf.mxu0
    %573 = vmatprep.mubr.bf16.mxu0 0
    %574 = vmatmul.mubr.bf16.gmra.mxu0 %v531
    %v575 = vpop.f32.mrf.mxu0
    %v576 = vadd.f32 0.0, %v575
    %v577 = vpop.f32.mrf.mxu0
    %v578 = vpop.f32.mrf.mxu0
    %v579 = vpop.f32.mrf.mxu0
    %580 = vdwg.mxu0
    %v581 = vadd.f32 %v518, %v568
    %v582 = vadd.f32 %v519, %v571
    %v583 = vadd.f32 %v520, %v576
    %v584 = vtanh.pop %v581
    %v585 = vtanh.pop %v582
    %v586 = vtanh.pop %v583
    %v587 = vxor.u32 %v581, 2147483648
    %v588 = vxor.u32 %v582, 2147483648
    %v589 = vxor.u32 %v583, 2147483648
    %v590 = vmul.f32 %v587, 1.442695
    %v591 = vpow.pop %v590
    %v592 = vmul.f32 %v588, 1.442695
    %v593 = vpow.pop %v592
    %v594 = vmul.f32 %v589, 1.442695
    %v595 = vpow.pop %v594
    %v596 = vadd.f32 %v591, 1.0
    %v597 = vadd.f32 %v593, 1.0
    %v598 = vadd.f32 %v595, 1.0
    %v599 = vrcp.pop %v596
    %v600 = vmul.f32 1.0, %v599
    %v601 = vrcp.pop %v597
    %v602 = vmul.f32 1.0, %v601
    %v603 = vrcp.pop %v598
    %v604 = vmul.f32 1.0, %v603
    %v605 = vsel %vm370, %v584, %v600
    %v606 = vsel %vm370, %v585, %v602
    %v607 = vsel %vm370, %v586, %v604
    %611 = vrot.lane.b32.xlu0 %v605, 64
    %v612 = vpop.permute.xlu0 %611
    %613 = vrot.lane.b32.xlu0 %v606, 64
    %v614 = vpop.permute.xlu0 %613
    %615 = vrot.lane.b32.xlu0 %v607, 64
    %v616 = vpop.permute.xlu0 %615
    %v620 = vmul.f32 %v605, %v612
    %v621 = vmul.f32 %v606, %v614
    %v622 = vmul.f32 %v607, %v616
    %626 = vrot.lane.b32.xlu0 %v494, 96
    %v627 = vpop.permute.xlu0 %626
    %628 = vrot.lane.b32.xlu0 %v495, 96
    %v629 = vpop.permute.xlu0 %628
    %630 = vrot.lane.b32.xlu0 %v496, 96
    %v631 = vpop.permute.xlu0 %630
    %v635 = vmul.f32 %v605, %v627
    %v636 = vmul.f32 %v606, %v629
    %v637 = vmul.f32 %v607, %v631
    %641 = vrot.lane.b32.xlu0 %v635, 32
    %v642 = vpop.permute.xlu0 %641
    %643 = vrot.lane.b32.xlu0 %v636, 32
    %v644 = vpop.permute.xlu0 %643
    %645 = vrot.lane.b32.xlu0 %v637, 32
    %v646 = vpop.permute.xlu0 %645
    %v650 = vadd.f32 %v620, %v642
    %v651 = vadd.f32 %v621, %v644
    %v652 = vadd.f32 %v622, %v646
    %v653 = vtanh.pop %v650
    %v654 = vtanh.pop %v651
    %v655 = vtanh.pop %v652
    %659 = vrot.lane.b32.xlu0 %v653, 32
    %v660 = vpop.permute.xlu0 %659
    %661 = vrot.lane.b32.xlu0 %v654, 32
    %v662 = vpop.permute.xlu0 %661
    %663 = vrot.lane.b32.xlu0 %v655, 32
    %v664 = vpop.permute.xlu0 %663
    %v668 = vmul.f32 %v605, %v660
    %v669 = vmul.f32 %v606, %v662
    %v670 = vmul.f32 %v607, %v664
    %v671 = vpack.c.bf16 %v669, %v668
    %v672 = vpack.c.bf16 %v670, %v670
    %s673 = scalar_lea.vmem [#allocation2], 48
    %v674 = vld [vmem:[%s673] sm:$0xff]
    %v675 = vld [vmem:[%s673 + $0x8] sm:$0xff]
    %v676 = vld [vmem:[%s673 + $0x10] sm:$0xff]
    %679 = vrot.lane.b32.xlu0 %v671, 96
    %v680 = vpop.permute.xlu0 %679
    %681 = vrot.lane.b32.xlu0 %v672, 96
    %v682 = vpop.permute.xlu0 %681
    %v684 = vsel %vm176, %v680, 0
    %v687 = vsel %vm176, %v682, 0
    %689 = vmatprep.subr.bf16.mxu0 0
    %690 = vmatpush1.bf16.msra.mxu0 0
    %691 = vmatprep.subr.bf16.mxu0 0
    %692 = vmatpush1.bf16.msra.mxu0 0
    %693 = vmatprep.subr.bf16.mxu0 0
    %694 = vmatpush1.bf16.msra.mxu0 0
    %695 = vmatprep.subr.bf16.mxu0 0
    %696 = vmatpush1.bf16.msra.mxu0 0
    %697 = vmatprep.subr.bf16.mxu0 0
    %698 = vmatpush1.bf16.msra.mxu0 0
    %699 = vmatprep.subr.bf16.mxu0 0
    %700 = vmatpush1.bf16.msra.mxu0 0
    %701 = vmatprep.subr.bf16.mxu0 0
    %702 = vmatpush1.bf16.msra.mxu0 %v383
    %703 = vmatprep.subr.bf16.mxu0 0
    %704 = vmatpush1.bf16.msra.mxu0 %v382
    %705 = vmatprep.subr.bf16.mxu0 0
    %706 = vmatpush2.bf16.msra.mxu0 0
    %707 = vmatprep.subr.bf16.mxu0 0
    %708 = vmatpush2.bf16.msra.mxu0 0
    %709 = vmatprep.subr.bf16.mxu0 0
    %710 = vmatpush2.bf16.msra.mxu0 0
    %711 = vmatprep.subr.bf16.mxu0 0
    %712 = vmatpush2.bf16.msra.mxu0 0
    %713 = vmatprep.subr.bf16.mxu0 0
    %714 = vmatpush2.bf16.msra.mxu0 0
    %715 = vmatprep.subr.bf16.mxu0 0
    %716 = vmatpush2.bf16.msra.mxu0 0
    %717 = vmatprep.subr.bf16.mxu0 0
    %718 = vmatpush2.bf16.msra.mxu0 0
    %719 = vmatprep.subr.bf16.mxu0 0
    %720 = vmatpush2.bf16.msra.mxu0 0
    %721 = vmatprep.mubr.bf16.mxu0 0
    %722 = vmatmul.mubr.bf16.gmra.mxu0 %v684
    %v723 = vpop.f32.mrf.mxu0
    %v724 = vadd.f32 0.0, %v723
    %v725 = vpop.f32.mrf.mxu0
    %v726 = vpop.f32.mrf.mxu0
    %v727 = vadd.f32 0.0, %v726
    %v728 = vpop.f32.mrf.mxu0
    %729 = vmatprep.mubr.bf16.mxu0 0
    %730 = vmatmul.mubr.bf16.gmra.mxu0 %v687
    %v731 = vpop.f32.mrf.mxu0
    %v732 = vadd.f32 0.0, %v731
    %v733 = vpop.f32.mrf.mxu0
    %v734 = vpop.f32.mrf.mxu0
    %v735 = vpop.f32.mrf.mxu0
    %736 = vdwg.mxu0
    %v737 = vadd.f32 %v674, %v724
    %v738 = vadd.f32 %v675, %v727
    %v739 = vadd.f32 %v676, %v732
    %v740 = vtanh.pop %v737
    %v741 = vtanh.pop %v738
    %v742 = vtanh.pop %v739
    %v743 = vxor.u32 %v737, 2147483648
    %v744 = vxor.u32 %v738, 2147483648
    %v745 = vxor.u32 %v739, 2147483648
    %v746 = vmul.f32 %v743, 1.442695
    %v747 = vpow.pop %v746
    %v748 = vmul.f32 %v744, 1.442695
    %v749 = vpow.pop %v748
    %v750 = vmul.f32 %v745, 1.442695
    %v751 = vpow.pop %v750
    %v752 = vadd.f32 %v747, 1.0
    %v753 = vadd.f32 %v749, 1.0
    %v754 = vadd.f32 %v751, 1.0
    %v755 = vrcp.pop %v752
    %v756 = vmul.f32 1.0, %v755
    %v757 = vrcp.pop %v753
    %v758 = vmul.f32 1.0, %v757
    %v759 = vrcp.pop %v754
    %v760 = vmul.f32 1.0, %v759
    %v761 = vsel %vm370, %v740, %v756
    %v762 = vsel %vm370, %v741, %v758
    %v763 = vsel %vm370, %v742, %v760
    %767 = vrot.lane.b32.xlu0 %v761, 64
    %v768 = vpop.permute.xlu0 %767
    %769 = vrot.lane.b32.xlu0 %v762, 64
    %v770 = vpop.permute.xlu0 %769
    %771 = vrot.lane.b32.xlu0 %v763, 64
    %v772 = vpop.permute.xlu0 %771
    %v776 = vmul.f32 %v761, %v768
    %v777 = vmul.f32 %v762, %v770
    %v778 = vmul.f32 %v763, %v772
    %782 = vrot.lane.b32.xlu0 %v650, 96
    %v783 = vpop.permute.xlu0 %782
    %784 = vrot.lane.b32.xlu0 %v651, 96
    %v785 = vpop.permute.xlu0 %784
    %786 = vrot.lane.b32.xlu0 %v652, 96
    %v787 = vpop.permute.xlu0 %786
    %v791 = vmul.f32 %v761, %v783
    %v792 = vmul.f32 %v762, %v785
    %v793 = vmul.f32 %v763, %v787
    %797 = vrot.lane.b32.xlu0 %v791, 32
    %v798 = vpop.permute.xlu0 %797
    %799 = vrot.lane.b32.xlu0 %v792, 32
    %v800 = vpop.permute.xlu0 %799
    %801 = vrot.lane.b32.xlu0 %v793, 32
    %v802 = vpop.permute.xlu0 %801
    %v806 = vadd.f32 %v776, %v798
    %v807 = vadd.f32 %v777, %v800
    %v808 = vadd.f32 %v778, %v802
    %v809 = vtanh.pop %v806
    %v810 = vtanh.pop %v807
    %v811 = vtanh.pop %v808
    %815 = vrot.lane.b32.xlu0 %v809, 32
    %v816 = vpop.permute.xlu0 %815
    %817 = vrot.lane.b32.xlu0 %v810, 32
    %v818 = vpop.permute.xlu0 %817
    %819 = vrot.lane.b32.xlu0 %v811, 32
    %v820 = vpop.permute.xlu0 %819
    %v824 = vmul.f32 %v761, %v816
    %v825 = vmul.f32 %v762, %v818
    %v826 = vmul.f32 %v763, %v820
    %v827 = vpack.c.bf16 %v825, %v824
    %v828 = vpack.c.bf16 %v826, %v826
    %s829 = scalar_lea.vmem [#allocation2], 72
    %v830 = vld [vmem:[%s829] sm:$0xff]
    %v831 = vld [vmem:[%s829 + $0x8] sm:$0xff]
    %v832 = vld [vmem:[%s829 + $0x10] sm:$0xff]
    %835 = vrot.lane.b32.xlu0 %v827, 96
    %v836 = vpop.permute.xlu0 %835
    %837 = vrot.lane.b32.xlu0 %v828, 96
    %v838 = vpop.permute.xlu0 %837
    %v840 = vsel %vm176, %v836, 0
    %v843 = vsel %vm176, %v838, 0
    %845 = vmatprep.subr.bf16.mxu0 0
    %846 = vmatpush1.bf16.msra.mxu0 0
    %847 = vmatprep.subr.bf16.mxu0 0
    %848 = vmatpush1.bf16.msra.mxu0 0
    %849 = vmatprep.subr.bf16.mxu0 0
    %850 = vmatpush1.bf16.msra.mxu0 0
    %851 = vmatprep.subr.bf16.mxu0 0
    %852 = vmatpush1.bf16.msra.mxu0 0
    %853 = vmatprep.subr.bf16.mxu0 0
    %854 = vmatpush1.bf16.msra.mxu0 0
    %855 = vmatprep.subr.bf16.mxu0 0
    %856 = vmatpush1.bf16.msra.mxu0 0
    %857 = vmatprep.subr.bf16.mxu0 0
    %858 = vmatpush1.bf16.msra.mxu0 %v383
    %859 = vmatprep.subr.bf16.mxu0 0
    %860 = vmatpush1.bf16.msra.mxu0 %v382
    %861 = vmatprep.subr.bf16.mxu0 0
    %862 = vmatpush2.bf16.msra.mxu0 0
    %863 = vmatprep.subr.bf16.mxu0 0
    %864 = vmatpush2.bf16.msra.mxu0 0
    %865 = vmatprep.subr.bf16.mxu0 0
    %866 = vmatpush2.bf16.msra.mxu0 0
    %867 = vmatprep.subr.bf16.mxu0 0
    %868 = vmatpush2.bf16.msra.mxu0 0
    %869 = vmatprep.subr.bf16.mxu0 0
    %870 = vmatpush2.bf16.msra.mxu0 0
    %871 = vmatprep.subr.bf16.mxu0 0
    %872 = vmatpush2.bf16.msra.mxu0 0
    %873 = vmatprep.subr.bf16.mxu0 0
    %874 = vmatpush2.bf16.msra.mxu0 0
    %875 = vmatprep.subr.bf16.mxu0 0
    %876 = vmatpush2.bf16.msra.mxu0 0
    %877 = vmatprep.mubr.bf16.mxu0 0
    %878 = vmatmul.mubr.bf16.gmra.mxu0 %v840
    %v879 = vpop.f32.mrf.mxu0
    %v880 = vadd.f32 0.0, %v879
    %v881 = vpop.f32.mrf.mxu0
    %v882 = vpop.f32.mrf.mxu0
    %v883 = vadd.f32 0.0, %v882
    %v884 = vpop.f32.mrf.mxu0
    %885 = vmatprep.mubr.bf16.mxu0 0
    %886 = vmatmul.mubr.bf16.gmra.mxu0 %v843
    %v887 = vpop.f32.mrf.mxu0
    %v888 = vadd.f32 0.0, %v887
    %v889 = vpop.f32.mrf.mxu0
    %v890 = vpop.f32.mrf.mxu0
    %v891 = vpop.f32.mrf.mxu0
    %892 = vdwg.mxu0
    %v893 = vadd.f32 %v830, %v880
    %v894 = vadd.f32 %v831, %v883
    %v895 = vadd.f32 %v832, %v888
    %v896 = vtanh.pop %v893
    %v897 = vtanh.pop %v894
    %v898 = vtanh.pop %v895
    %v899 = vxor.u32 %v893, 2147483648
    %v900 = vxor.u32 %v894, 2147483648
    %v901 = vxor.u32 %v895, 2147483648
    %v902 = vmul.f32 %v899, 1.442695
    %v903 = vpow.pop %v902
    %v904 = vmul.f32 %v900, 1.442695
    %v905 = vpow.pop %v904
    %v906 = vmul.f32 %v901, 1.442695
    %v907 = vpow.pop %v906
    %v908 = vadd.f32 %v903, 1.0
    %v909 = vadd.f32 %v905, 1.0
    %v910 = vadd.f32 %v907, 1.0
    %v911 = vrcp.pop %v908
    %v912 = vmul.f32 1.0, %v911
    %v913 = vrcp.pop %v909
    %v914 = vmul.f32 1.0, %v913
    %v915 = vrcp.pop %v910
    %v916 = vmul.f32 1.0, %v915
    %v917 = vsel %vm370, %v896, %v912
    %v918 = vsel %vm370, %v897, %v914
    %v919 = vsel %vm370, %v898, %v916
    %923 = vrot.lane.b32.xlu0 %v917, 64
    %v924 = vpop.permute.xlu0 %923
    %925 = vrot.lane.b32.xlu0 %v918, 64
    %v926 = vpop.permute.xlu0 %925
    %927 = vrot.lane.b32.xlu0 %v919, 64
    %v928 = vpop.permute.xlu0 %927
    %v932 = vmul.f32 %v917, %v924
    %v933 = vmul.f32 %v918, %v926
    %v934 = vmul.f32 %v919, %v928
    %938 = vrot.lane.b32.xlu0 %v806, 96
    %v939 = vpop.permute.xlu0 %938
    %940 = vrot.lane.b32.xlu0 %v807, 96
    %v941 = vpop.permute.xlu0 %940
    %942 = vrot.lane.b32.xlu0 %v808, 96
    %v943 = vpop.permute.xlu0 %942
    %v947 = vmul.f32 %v917, %v939
    %v948 = vmul.f32 %v918, %v941
    %v949 = vmul.f32 %v919, %v943
    %953 = vrot.lane.b32.xlu0 %v947, 32
    %v954 = vpop.permute.xlu0 %953
    %955 = vrot.lane.b32.xlu0 %v948, 32
    %v956 = vpop.permute.xlu0 %955
    %957 = vrot.lane.b32.xlu0 %v949, 32
    %v958 = vpop.permute.xlu0 %957
    %v962 = vadd.f32 %v932, %v954
    %v963 = vadd.f32 %v933, %v956
    %v964 = vadd.f32 %v934, %v958
    %v965 = vtanh.pop %v962
    %v966 = vtanh.pop %v963
    %v967 = vtanh.pop %v964
    %971 = vrot.lane.b32.xlu0 %v965, 32
    %v972 = vpop.permute.xlu0 %971
    %973 = vrot.lane.b32.xlu0 %v966, 32
    %v974 = vpop.permute.xlu0 %973
    %975 = vrot.lane.b32.xlu0 %v967, 32
    %v976 = vpop.permute.xlu0 %975
    %v980 = vmul.f32 %v917, %v972
    %v981 = vmul.f32 %v918, %v974
    %v982 = vmul.f32 %v919, %v976
    %v983 = vpack.c.bf16 %v981, %v980
    %v984 = vpack.c.bf16 %v982, %v982
    %s985 = scalar_lea.vmem [#allocation2], 96
    %v986 = vld [vmem:[%s985] sm:$0xff]
    %v987 = vld [vmem:[%s985 + $0x8] sm:$0xff]
    %v988 = vld [vmem:[%s985 + $0x10] sm:$0xff]
    %991 = vrot.lane.b32.xlu0 %v983, 96
    %v992 = vpop.permute.xlu0 %991
    %993 = vrot.lane.b32.xlu0 %v984, 96
    %v994 = vpop.permute.xlu0 %993
    %v996 = vsel %vm176, %v992, 0
    %v999 = vsel %vm176, %v994, 0
    %1001 = vmatprep.subr.bf16.mxu0 0
    %1002 = vmatpush1.bf16.msra.mxu0 0
    %1003 = vmatprep.subr.bf16.mxu0 0
    %1004 = vmatpush1.bf16.msra.mxu0 0
    %1005 = vmatprep.subr.bf16.mxu0 0
    %1006 = vmatpush1.bf16.msra.mxu0 0
    %1007 = vmatprep.subr.bf16.mxu0 0
    %1008 = vmatpush1.bf16.msra.mxu0 0
    %1009 = vmatprep.subr.bf16.mxu0 0
    %1010 = vmatpush1.bf16.msra.mxu0 0
    %1011 = vmatprep.subr.bf16.mxu0 0
    %1012 = vmatpush1.bf16.msra.mxu0 0
    %1013 = vmatprep.subr.bf16.mxu0 0
    %1014 = vmatpush1.bf16.msra.mxu0 %v383
    %1015 = vmatprep.subr.bf16.mxu0 0
    %1016 = vmatpush1.bf16.msra.mxu0 %v382
    %1017 = vmatprep.subr.bf16.mxu0 0
    %1018 = vmatpush2.bf16.msra.mxu0 0
    %1019 = vmatprep.subr.bf16.mxu0 0
    %1020 = vmatpush2.bf16.msra.mxu0 0
    %1021 = vmatprep.subr.bf16.mxu0 0
    %1022 = vmatpush2.bf16.msra.mxu0 0
    %1023 = vmatprep.subr.bf16.mxu0 0
    %1024 = vmatpush2.bf16.msra.mxu0 0
    %1025 = vmatprep.subr.bf16.mxu0 0
    %1026 = vmatpush2.bf16.msra.mxu0 0
    %1027 = vmatprep.subr.bf16.mxu0 0
    %1028 = vmatpush2.bf16.msra.mxu0 0
    %1029 = vmatprep.subr.bf16.mxu0 0
    %1030 = vmatpush2.bf16.msra.mxu0 0
    %1031 = vmatprep.subr.bf16.mxu0 0
    %1032 = vmatpush2.bf16.msra.mxu0 0
    %1033 = vmatprep.mubr.bf16.mxu0 0
    %1034 = vmatmul.mubr.bf16.gmra.mxu0 %v996
    %v1035 = vpop.f32.mrf.mxu0
    %v1036 = vadd.f32 0.0, %v1035
    %v1037 = vpop.f32.mrf.mxu0
    %v1038 = vpop.f32.mrf.mxu0
    %v1039 = vadd.f32 0.0, %v1038
    %v1040 = vpop.f32.mrf.mxu0
    %1041 = vmatprep.mubr.bf16.mxu0 0
    %1042 = vmatmul.mubr.bf16.gmra.mxu0 %v999
    %v1043 = vpop.f32.mrf.mxu0
    %v1044 = vadd.f32 0.0, %v1043
    %v1045 = vpop.f32.mrf.mxu0
    %v1046 = vpop.f32.mrf.mxu0
    %v1047 = vpop.f32.mrf.mxu0
    %1048 = vdwg.mxu0
    %v1049 = vadd.f32 %v986, %v1036
    %v1050 = vadd.f32 %v987, %v1039
    %v1051 = vadd.f32 %v988, %v1044
    %v1052 = vtanh.pop %v1049
    %v1053 = vtanh.pop %v1050
    %v1054 = vtanh.pop %v1051
    %v1055 = vxor.u32 %v1049, 2147483648
    %v1056 = vxor.u32 %v1050, 2147483648
    %v1057 = vxor.u32 %v1051, 2147483648
    %v1058 = vmul.f32 %v1055, 1.442695
    %v1059 = vpow.pop %v1058
    %v1060 = vmul.f32 %v1056, 1.442695
    %v1061 = vpow.pop %v1060
    %v1062 = vmul.f32 %v1057, 1.442695
    %v1063 = vpow.pop %v1062
    %v1064 = vadd.f32 %v1059, 1.0
    %v1065 = vadd.f32 %v1061, 1.0
    %v1066 = vadd.f32 %v1063, 1.0
    %v1067 = vrcp.pop %v1064
    %v1068 = vmul.f32 1.0, %v1067
    %v1069 = vrcp.pop %v1065
    %v1070 = vmul.f32 1.0, %v1069
    %v1071 = vrcp.pop %v1066
    %v1072 = vmul.f32 1.0, %v1071
    %v1073 = vsel %vm370, %v1052, %v1068
    %v1074 = vsel %vm370, %v1053, %v1070
    %v1075 = vsel %vm370, %v1054, %v1072
    %1079 = vrot.lane.b32.xlu0 %v1073, 64
    %v1080 = vpop.permute.xlu0 %1079
    %1081 = vrot.lane.b32.xlu0 %v1074, 64
    %v1082 = vpop.permute.xlu0 %1081
    %1083 = vrot.lane.b32.xlu0 %v1075, 64
    %v1084 = vpop.permute.xlu0 %1083
    %v1088 = vmul.f32 %v1073, %v1080
    %v1089 = vmul.f32 %v1074, %v1082
    %v1090 = vmul.f32 %v1075, %v1084
    %1094 = vrot.lane.b32.xlu0 %v962, 96
    %v1095 = vpop.permute.xlu0 %1094
    %1096 = vrot.lane.b32.xlu0 %v963, 96
    %v1097 = vpop.permute.xlu0 %1096
    %1098 = vrot.lane.b32.xlu0 %v964, 96
    %v1099 = vpop.permute.xlu0 %1098
    %v1103 = vmul.f32 %v1073, %v1095
    %v1104 = vmul.f32 %v1074, %v1097
    %v1105 = vmul.f32 %v1075, %v1099
    %1109 = vrot.lane.b32.xlu0 %v1103, 32
    %v1110 = vpop.permute.xlu0 %1109
    %1111 = vrot.lane.b32.xlu0 %v1104, 32
    %v1112 = vpop.permute.xlu0 %1111
    %1113 = vrot.lane.b32.xlu0 %v1105, 32
    %v1114 = vpop.permute.xlu0 %1113
    %v1118 = vadd.f32 %v1088, %v1110
    %v1119 = vadd.f32 %v1089, %v1112
    %v1120 = vadd.f32 %v1090, %v1114
    %v1121 = vtanh.pop %v1118
    %v1122 = vtanh.pop %v1119
    %v1123 = vtanh.pop %v1120
    %1127 = vrot.lane.b32.xlu0 %v1121, 32
    %v1128 = vpop.permute.xlu0 %1127
    %1129 = vrot.lane.b32.xlu0 %v1122, 32
    %v1130 = vpop.permute.xlu0 %1129
    %1131 = vrot.lane.b32.xlu0 %v1123, 32
    %v1132 = vpop.permute.xlu0 %1131
    %v1136 = vmul.f32 %v1073, %v1128
    %v1137 = vmul.f32 %v1074, %v1130
    %v1138 = vmul.f32 %v1075, %v1132
    %v1139 = vpack.c.bf16 %v1137, %v1136
    %v1140 = vpack.c.bf16 %v1138, %v1138
    %s1141 = scalar_lea.vmem [#allocation2], 120
    %v1142 = vld [vmem:[%s1141] sm:$0xff]
    %v1143 = vld [vmem:[%s1141 + $0x8] sm:$0xff]
    %v1144 = vld [vmem:[%s1141 + $0x10] sm:$0xff]
    %1147 = vrot.lane.b32.xlu0 %v1139, 96
    %v1148 = vpop.permute.xlu0 %1147
    %1149 = vrot.lane.b32.xlu0 %v1140, 96
    %v1150 = vpop.permute.xlu0 %1149
    %v1152 = vsel %vm176, %v1148, 0
    %v1155 = vsel %vm176, %v1150, 0
    %1157 = vmatprep.subr.bf16.mxu0 0
    %1158 = vmatpush1.bf16.msra.mxu0 0
    %1159 = vmatprep.subr.bf16.mxu0 0
    %1160 = vmatpush1.bf16.msra.mxu0 0
    %1161 = vmatprep.subr.bf16.mxu0 0
    %1162 = vmatpush1.bf16.msra.mxu0 0
    %1163 = vmatprep.subr.bf16.mxu0 0
    %1164 = vmatpush1.bf16.msra.mxu0 0
    %1165 = vmatprep.subr.bf16.mxu0 0
    %1166 = vmatpush1.bf16.msra.mxu0 0
    %1167 = vmatprep.subr.bf16.mxu0 0
    %1168 = vmatpush1.bf16.msra.mxu0 0
    %1169 = vmatprep.subr.bf16.mxu0 0
    %1170 = vmatpush1.bf16.msra.mxu0 %v383
    %1171 = vmatprep.subr.bf16.mxu0 0
    %1172 = vmatpush1.bf16.msra.mxu0 %v382
    %1173 = vmatprep.subr.bf16.mxu0 0
    %1174 = vmatpush2.bf16.msra.mxu0 0
    %1175 = vmatprep.subr.bf16.mxu0 0
    %1176 = vmatpush2.bf16.msra.mxu0 0
    %1177 = vmatprep.subr.bf16.mxu0 0
    %1178 = vmatpush2.bf16.msra.mxu0 0
    %1179 = vmatprep.subr.bf16.mxu0 0
    %1180 = vmatpush2.bf16.msra.mxu0 0
    %1181 = vmatprep.subr.bf16.mxu0 0
    %1182 = vmatpush2.bf16.msra.mxu0 0
    %1183 = vmatprep.subr.bf16.mxu0 0
    %1184 = vmatpush2.bf16.msra.mxu0 0
    %1185 = vmatprep.subr.bf16.mxu0 0
    %1186 = vmatpush2.bf16.msra.mxu0 0
    %1187 = vmatprep.subr.bf16.mxu0 0
    %1188 = vmatpush2.bf16.msra.mxu0 0
    %1189 = vmatprep.mubr.bf16.mxu0 0
    %1190 = vmatmul.mubr.bf16.gmra.mxu0 %v1152
    %v1191 = vpop.f32.mrf.mxu0
    %v1192 = vadd.f32 0.0, %v1191
    %v1193 = vpop.f32.mrf.mxu0
    %v1194 = vpop.f32.mrf.mxu0
    %v1195 = vadd.f32 0.0, %v1194
    %v1196 = vpop.f32.mrf.mxu0
    %1197 = vmatprep.mubr.bf16.mxu0 0
    %1198 = vmatmul.mubr.bf16.gmra.mxu0 %v1155
    %v1199 = vpop.f32.mrf.mxu0
    %v1200 = vadd.f32 0.0, %v1199
    %v1201 = vpop.f32.mrf.mxu0
    %v1202 = vpop.f32.mrf.mxu0
    %v1203 = vpop.f32.mrf.mxu0
    %1204 = vdwg.mxu0
    %v1205 = vadd.f32 %v1142, %v1192
    %v1206 = vadd.f32 %v1143, %v1195
    %v1207 = vadd.f32 %v1144, %v1200
    %v1208 = vtanh.pop %v1205
    %v1209 = vtanh.pop %v1206
    %v1210 = vtanh.pop %v1207
    %v1211 = vxor.u32 %v1205, 2147483648
    %v1212 = vxor.u32 %v1206, 2147483648
    %v1213 = vxor.u32 %v1207, 2147483648
    %v1214 = vmul.f32 %v1211, 1.442695
    %v1215 = vpow.pop %v1214
    %v1216 = vmul.f32 %v1212, 1.442695
    %v1217 = vpow.pop %v1216
    %v1218 = vmul.f32 %v1213, 1.442695
    %v1219 = vpow.pop %v1218
    %v1220 = vadd.f32 %v1215, 1.0
    %v1221 = vadd.f32 %v1217, 1.0
    %v1222 = vadd.f32 %v1219, 1.0
    %v1223 = vrcp.pop %v1220
    %v1224 = vmul.f32 1.0, %v1223
    %v1225 = vrcp.pop %v1221
    %v1226 = vmul.f32 1.0, %v1225
    %v1227 = vrcp.pop %v1222
    %v1228 = vmul.f32 1.0, %v1227
    %v1229 = vsel %vm370, %v1208, %v1224
    %v1230 = vsel %vm370, %v1209, %v1226
    %v1231 = vsel %vm370, %v1210, %v1228
    %1235 = vrot.lane.b32.xlu0 %v1229, 64
    %v1236 = vpop.permute.xlu0 %1235
    %1237 = vrot.lane.b32.xlu0 %v1230, 64
    %v1238 = vpop.permute.xlu0 %1237
    %1239 = vrot.lane.b32.xlu0 %v1231, 64
    %v1240 = vpop.permute.xlu0 %1239
    %v1244 = vmul.f32 %v1229, %v1236
    %v1245 = vmul.f32 %v1230, %v1238
    %v1246 = vmul.f32 %v1231, %v1240
    %1250 = vrot.lane.b32.xlu0 %v1118, 96
    %v1251 = vpop.permute.xlu0 %1250
    %1252 = vrot.lane.b32.xlu0 %v1119, 96
    %v1253 = vpop.permute.xlu0 %1252
    %1254 = vrot.lane.b32.xlu0 %v1120, 96
    %v1255 = vpop.permute.xlu0 %1254
    %v1259 = vmul.f32 %v1229, %v1251
    %v1260 = vmul.f32 %v1230, %v1253
    %v1261 = vmul.f32 %v1231, %v1255
    %1265 = vrot.lane.b32.xlu0 %v1259, 32
    %v1266 = vpop.permute.xlu0 %1265
    %1267 = vrot.lane.b32.xlu0 %v1260, 32
    %v1268 = vpop.permute.xlu0 %1267
    %1269 = vrot.lane.b32.xlu0 %v1261, 32
    %v1270 = vpop.permute.xlu0 %1269
    %v1274 = vadd.f32 %v1244, %v1266
    %v1275 = vadd.f32 %v1245, %v1268
    %v1276 = vadd.f32 %v1246, %v1270
    %v1277 = vtanh.pop %v1274
    %v1278 = vtanh.pop %v1275
    %v1279 = vtanh.pop %v1276
    %1283 = vrot.lane.b32.xlu0 %v1277, 32
    %v1284 = vpop.permute.xlu0 %1283
    %1285 = vrot.lane.b32.xlu0 %v1278, 32
    %v1286 = vpop.permute.xlu0 %1285
    %1287 = vrot.lane.b32.xlu0 %v1279, 32
    %v1288 = vpop.permute.xlu0 %1287
    %v1292 = vmul.f32 %v1229, %v1284
    %v1293 = vmul.f32 %v1230, %v1286
    %v1294 = vmul.f32 %v1231, %v1288
    %v1295 = vpack.c.bf16 %v1293, %v1292
    %v1296 = vpack.c.bf16 %v1294, %v1294
    %s1297 = scalar_lea.vmem [#allocation2], 144
    %v1298 = vld [vmem:[%s1297] sm:$0xff]
    %v1299 = vld [vmem:[%s1297 + $0x8] sm:$0xff]
    %v1300 = vld [vmem:[%s1297 + $0x10] sm:$0xff]
    %1303 = vrot.lane.b32.xlu0 %v1295, 96
    %v1304 = vpop.permute.xlu0 %1303
    %1305 = vrot.lane.b32.xlu0 %v1296, 96
    %v1306 = vpop.permute.xlu0 %1305
    %v1308 = vsel %vm176, %v1304, 0
    %v1311 = vsel %vm176, %v1306, 0
    %1313 = vmatprep.subr.bf16.mxu0 0
    %1314 = vmatpush1.bf16.msra.mxu0 0
    %1315 = vmatprep.subr.bf16.mxu0 0
    %1316 = vmatpush1.bf16.msra.mxu0 0
    %1317 = vmatprep.subr.bf16.mxu0 0
    %1318 = vmatpush1.bf16.msra.mxu0 0
    %1319 = vmatprep.subr.bf16.mxu0 0
    %1320 = vmatpush1.bf16.msra.mxu0 0
    %1321 = vmatprep.subr.bf16.mxu0 0
    %1322 = vmatpush1.bf16.msra.mxu0 0
    %1323 = vmatprep.subr.bf16.mxu0 0
    %1324 = vmatpush1.bf16.msra.mxu0 0
    %1325 = vmatprep.subr.bf16.mxu0 0
    %1326 = vmatpush1.bf16.msra.mxu0 %v383
    %1327 = vmatprep.subr.bf16.mxu0 0
    %1328 = vmatpush1.bf16.msra.mxu0 %v382
    %1329 = vmatprep.subr.bf16.mxu0 0
    %1330 = vmatpush2.bf16.msra.mxu0 0
    %1331 = vmatprep.subr.bf16.mxu0 0
    %1332 = vmatpush2.bf16.msra.mxu0 0
    %1333 = vmatprep.subr.bf16.mxu0 0
    %1334 = vmatpush2.bf16.msra.mxu0 0
    %1335 = vmatprep.subr.bf16.mxu0 0
    %1336 = vmatpush2.bf16.msra.mxu0 0
    %1337 = vmatprep.subr.bf16.mxu0 0
    %1338 = vmatpush2.bf16.msra.mxu0 0
    %1339 = vmatprep.subr.bf16.mxu0 0
    %1340 = vmatpush2.bf16.msra.mxu0 0
    %1341 = vmatprep.subr.bf16.mxu0 0
    %1342 = vmatpush2.bf16.msra.mxu0 0
    %1343 = vmatprep.subr.bf16.mxu0 0
    %1344 = vmatpush2.bf16.msra.mxu0 0
    %1345 = vmatprep.mubr.bf16.mxu0 0
    %1346 = vmatmul.mubr.bf16.gmra.mxu0 %v1308
    %v1347 = vpop.f32.mrf.mxu0
    %v1348 = vadd.f32 0.0, %v1347
    %v1349 = vpop.f32.mrf.mxu0
    %v1350 = vpop.f32.mrf.mxu0
    %v1351 = vadd.f32 0.0, %v1350
    %v1352 = vpop.f32.mrf.mxu0
    %1353 = vmatprep.mubr.bf16.mxu0 0
    %1354 = vmatmul.mubr.bf16.gmra.mxu0 %v1311
    %v1355 = vpop.f32.mrf.mxu0
    %v1356 = vadd.f32 0.0, %v1355
    %v1357 = vpop.f32.mrf.mxu0
    %v1358 = vpop.f32.mrf.mxu0
    %v1359 = vpop.f32.mrf.mxu0
    %1360 = vdwg.mxu0
    %v1361 = vadd.f32 %v1298, %v1348
    %v1362 = vadd.f32 %v1299, %v1351
    %v1363 = vadd.f32 %v1300, %v1356
    %v1364 = vtanh.pop %v1361
    %v1365 = vtanh.pop %v1362
    %v1366 = vtanh.pop %v1363
    %v1367 = vxor.u32 %v1361, 2147483648
    %v1368 = vxor.u32 %v1362, 2147483648
    %v1369 = vxor.u32 %v1363, 2147483648
    %v1370 = vmul.f32 %v1367, 1.442695
    %v1371 = vpow.pop %v1370
    %v1372 = vmul.f32 %v1368, 1.442695
    %v1373 = vpow.pop %v1372
    %v1374 = vmul.f32 %v1369, 1.442695
    %v1375 = vpow.pop %v1374
    %v1376 = vadd.f32 %v1371, 1.0
    %v1377 = vadd.f32 %v1373, 1.0
    %v1378 = vadd.f32 %v1375, 1.0
    %v1379 = vrcp.pop %v1376
    %v1380 = vmul.f32 1.0, %v1379
    %v1381 = vrcp.pop %v1377
    %v1382 = vmul.f32 1.0, %v1381
    %v1383 = vrcp.pop %v1378
    %v1384 = vmul.f32 1.0, %v1383
    %v1385 = vsel %vm370, %v1364, %v1380
    %v1386 = vsel %vm370, %v1365, %v1382
    %v1387 = vsel %vm370, %v1366, %v1384
    %1391 = vrot.lane.b32.xlu0 %v1385, 64
    %v1392 = vpop.permute.xlu0 %1391
    %1393 = vrot.lane.b32.xlu0 %v1386, 64
    %v1394 = vpop.permute.xlu0 %1393
    %1395 = vrot.lane.b32.xlu0 %v1387, 64
    %v1396 = vpop.permute.xlu0 %1395
    %v1400 = vmul.f32 %v1385, %v1392
    %v1401 = vmul.f32 %v1386, %v1394
    %v1402 = vmul.f32 %v1387, %v1396
    %1406 = vrot.lane.b32.xlu0 %v1274, 96
    %v1407 = vpop.permute.xlu0 %1406
    %1408 = vrot.lane.b32.xlu0 %v1275, 96
    %v1409 = vpop.permute.xlu0 %1408
    %1410 = vrot.lane.b32.xlu0 %v1276, 96
    %v1411 = vpop.permute.xlu0 %1410
    %v1415 = vmul.f32 %v1385, %v1407
    %v1416 = vmul.f32 %v1386, %v1409
    %v1417 = vmul.f32 %v1387, %v1411
    %1421 = vrot.lane.b32.xlu0 %v1415, 32
    %v1422 = vpop.permute.xlu0 %1421
    %1423 = vrot.lane.b32.xlu0 %v1416, 32
    %v1424 = vpop.permute.xlu0 %1423
    %1425 = vrot.lane.b32.xlu0 %v1417, 32
    %v1426 = vpop.permute.xlu0 %1425
    %v1430 = vadd.f32 %v1400, %v1422
    %v1431 = vadd.f32 %v1401, %v1424
    %v1432 = vadd.f32 %v1402, %v1426
    %v1433 = vtanh.pop %v1430
    %v1434 = vtanh.pop %v1431
    %v1435 = vtanh.pop %v1432
    %1439 = vrot.lane.b32.xlu0 %v1433, 32
    %v1440 = vpop.permute.xlu0 %1439
    %1441 = vrot.lane.b32.xlu0 %v1434, 32
    %v1442 = vpop.permute.xlu0 %1441
    %1443 = vrot.lane.b32.xlu0 %v1435, 32
    %v1444 = vpop.permute.xlu0 %1443
    %v1448 = vmul.f32 %v1385, %v1440
    %v1449 = vmul.f32 %v1386, %v1442
    %v1450 = vmul.f32 %v1387, %v1444
    %v1451 = vpack.c.bf16 %v1449, %v1448
    %v1452 = vpack.c.bf16 %v1450, %v1450
    %s1453 = scalar_lea.vmem [#allocation2], 168
    %v1454 = vld [vmem:[%s1453] sm:$0xff]
    %v1455 = vld [vmem:[%s1453 + $0x8] sm:$0xff]
    %v1456 = vld [vmem:[%s1453 + $0x10] sm:$0xff]
    %1459 = vrot.lane.b32.xlu0 %v1451, 96
    %v1460 = vpop.permute.xlu0 %1459
    %1461 = vrot.lane.b32.xlu0 %v1452, 96
    %v1462 = vpop.permute.xlu0 %1461
    %v1464 = vsel %vm176, %v1460, 0
    %v1467 = vsel %vm176, %v1462, 0
    %1469 = vmatprep.subr.bf16.mxu0 0
    %1470 = vmatpush1.bf16.msra.mxu0 0
    %1471 = vmatprep.subr.bf16.mxu0 0
    %1472 = vmatpush1.bf16.msra.mxu0 0
    %1473 = vmatprep.subr.bf16.mxu0 0
    %1474 = vmatpush1.bf16.msra.mxu0 0
    %1475 = vmatprep.subr.bf16.mxu0 0
    %1476 = vmatpush1.bf16.msra.mxu0 0
    %1477 = vmatprep.subr.bf16.mxu0 0
    %1478 = vmatpush1.bf16.msra.mxu0 0
    %1479 = vmatprep.subr.bf16.mxu0 0
    %1480 = vmatpush1.bf16.msra.mxu0 0
    %1481 = vmatprep.subr.bf16.mxu0 0
    %1482 = vmatpush1.bf16.msra.mxu0 %v383
    %1483 = vmatprep.subr.bf16.mxu0 0
    %1484 = vmatpush1.bf16.msra.mxu0 %v382
    %1485 = vmatprep.subr.bf16.mxu0 0
    %1486 = vmatpush2.bf16.msra.mxu0 0
    %1487 = vmatprep.subr.bf16.mxu0 0
    %1488 = vmatpush2.bf16.msra.mxu0 0
    %1489 = vmatprep.subr.bf16.mxu0 0
    %1490 = vmatpush2.bf16.msra.mxu0 0
    %1491 = vmatprep.subr.bf16.mxu0 0
    %1492 = vmatpush2.bf16.msra.mxu0 0
    %1493 = vmatprep.subr.bf16.mxu0 0
    %1494 = vmatpush2.bf16.msra.mxu0 0
    %1495 = vmatprep.subr.bf16.mxu0 0
    %1496 = vmatpush2.bf16.msra.mxu0 0
    %1497 = vmatprep.subr.bf16.mxu0 0
    %1498 = vmatpush2.bf16.msra.mxu0 0
    %1499 = vmatprep.subr.bf16.mxu0 0
    %1500 = vmatpush2.bf16.msra.mxu0 0
    %1501 = vmatprep.mubr.bf16.mxu0 0
    %1502 = vmatmul.mubr.bf16.gmra.mxu0 %v1464
    %v1503 = vpop.f32.mrf.mxu0
    %v1504 = vadd.f32 0.0, %v1503
    %v1505 = vpop.f32.mrf.mxu0
    %v1506 = vpop.f32.mrf.mxu0
    %v1507 = vadd.f32 0.0, %v1506
    %v1508 = vpop.f32.mrf.mxu0
    %1509 = vmatprep.mubr.bf16.mxu0 0
    %1510 = vmatmul.mubr.bf16.gmra.mxu0 %v1467
    %v1511 = vpop.f32.mrf.mxu0
    %v1512 = vadd.f32 0.0, %v1511
    %v1513 = vpop.f32.mrf.mxu0
    %v1514 = vpop.f32.mrf.mxu0
    %v1515 = vpop.f32.mrf.mxu0
    %1516 = vdwg.mxu0
    %v1517 = vadd.f32 %v1454, %v1504
    %v1518 = vadd.f32 %v1455, %v1507
    %v1519 = vadd.f32 %v1456, %v1512
    %v1520 = vtanh.pop %v1517
    %v1521 = vtanh.pop %v1518
    %v1522 = vtanh.pop %v1519
    %v1523 = vxor.u32 %v1517, 2147483648
    %v1524 = vxor.u32 %v1518, 2147483648
    %v1525 = vxor.u32 %v1519, 2147483648
    %v1526 = vmul.f32 %v1523, 1.442695
    %v1527 = vpow.pop %v1526
    %v1528 = vmul.f32 %v1524, 1.442695
    %v1529 = vpow.pop %v1528
    %v1530 = vmul.f32 %v1525, 1.442695
    %v1531 = vpow.pop %v1530
    %v1532 = vadd.f32 %v1527, 1.0
    %v1533 = vadd.f32 %v1529, 1.0
    %v1534 = vadd.f32 %v1531, 1.0
    %v1535 = vrcp.pop %v1532
    %v1536 = vmul.f32 1.0, %v1535
    %v1537 = vrcp.pop %v1533
    %v1538 = vmul.f32 1.0, %v1537
    %v1539 = vrcp.pop %v1534
    %v1540 = vmul.f32 1.0, %v1539
    %v1541 = vsel %vm370, %v1520, %v1536
    %v1542 = vsel %vm370, %v1521, %v1538
    %v1543 = vsel %vm370, %v1522, %v1540
    %1547 = vrot.lane.b32.xlu0 %v1541, 64
    %v1548 = vpop.permute.xlu0 %1547
    %1549 = vrot.lane.b32.xlu0 %v1542, 64
    %v1550 = vpop.permute.xlu0 %1549
    %1551 = vrot.lane.b32.xlu0 %v1543, 64
    %v1552 = vpop.permute.xlu0 %1551
    %v1556 = vmul.f32 %v1541, %v1548
    %v1557 = vmul.f32 %v1542, %v1550
    %v1558 = vmul.f32 %v1543, %v1552
    %1562 = vrot.lane.b32.xlu0 %v1430, 96
    %v1563 = vpop.permute.xlu0 %1562
    %1564 = vrot.lane.b32.xlu0 %v1431, 96
    %v1565 = vpop.permute.xlu0 %1564
    %1566 = vrot.lane.b32.xlu0 %v1432, 96
    %v1567 = vpop.permute.xlu0 %1566
    %v1571 = vmul.f32 %v1541, %v1563
    %v1572 = vmul.f32 %v1542, %v1565
    %v1573 = vmul.f32 %v1543, %v1567
    %1577 = vrot.lane.b32.xlu0 %v1571, 32
    %v1578 = vpop.permute.xlu0 %1577
    %1579 = vrot.lane.b32.xlu0 %v1572, 32
    %v1580 = vpop.permute.xlu0 %1579
    %1581 = vrot.lane.b32.xlu0 %v1573, 32
    %v1582 = vpop.permute.xlu0 %1581
    %v1586 = vadd.f32 %v1556, %v1578
    %v1587 = vadd.f32 %v1557, %v1580
    %v1588 = vadd.f32 %v1558, %v1582
    %v1589 = vmul.f32 %v1586, %v1587
    %v1590 = vsel %vm176, %v1589, 0.0
    %1591 = vadd.xlane.f32.xlu0 %v1590
    %v1592 = vpop.xlane.xlu0 %1591
    %v1593 = vmul.f32 %v1586, %v1586
    %v1594 = vsel %vm176, %v1593, 0.0
    %1595 = vadd.xlane.f32.xlu0 %v1594
    %v1596 = vpop.xlane.xlu0 %1595
    %v1597 = vrsqrt.pop %v1596
    %v1598 = vmul.f32 %v1596, %v1597
    %vm1599 = vcmp.eq.f32.partialorder %v1596, inf
    %v1600 = vsel %vm1599, %v1596, %v1598
    %vm1601 = vcmp.eq.f32.partialorder %v1596, 0.0
    %v1602 = vand.u32 %v1596, 2147483648
    %v1603 = vsel %vm1601, %v1602, %v1600
    %v1604 = vmul.f32 %v1587, %v1587
    %v1605 = vsel %vm176, %v1604, 0.0
    %1606 = vadd.xlane.f32.xlu0 %v1605
    %v1607 = vpop.xlane.xlu0 %1606
    %v1608 = vrsqrt.pop %v1607
    %v1609 = vmul.f32 %v1607, %v1608
    %vm1610 = vcmp.eq.f32.partialorder %v1607, inf
    %v1611 = vsel %vm1610, %v1607, %v1609
    %vm1612 = vcmp.eq.f32.partialorder %v1607, 0.0
    %v1613 = vand.u32 %v1607, 2147483648
    %v1614 = vsel %vm1612, %v1613, %v1611
    %v1615 = vmul.f32 %v1603, %v1614
    %v1616 = vmax.f32 %v1615, 1e-08
    %v1617 = vrcp.pop %v1616
    %v1618 = vmul.f32 %v1592, %v1617
    %v1619 = vmul.f32 %v1586, %v1588
    %v1620 = vsel %vm176, %v1619, 0.0
    %1621 = vadd.xlane.f32.xlu0 %v1620
    %v1622 = vpop.xlane.xlu0 %1621
    %v1623 = vmul.f32 %v1588, %v1588
    %v1624 = vsel %vm176, %v1623, 0.0
    %1625 = vadd.xlane.f32.xlu0 %v1624
    %v1626 = vpop.xlane.xlu0 %1625
    %v1627 = vrsqrt.pop %v1626
    %v1628 = vmul.f32 %v1626, %v1627
    %vm1629 = vcmp.eq.f32.partialorder %v1626, inf
    %v1630 = vsel %vm1629, %v1626, %v1628
    %vm1631 = vcmp.eq.f32.partialorder %v1626, 0.0
    %v1632 = vand.u32 %v1626, 2147483648
    %v1633 = vsel %vm1631, %v1632, %v1630
    %v1634 = vmul.f32 %v1603, %v1633
    %v1635 = vmax.f32 %v1634, 1e-08
    %v1636 = vrcp.pop %v1635
    %v1637 = vmul.f32 %v1622, %v1636
    %v1638 = vstv %s73
    %v1639 = vsub.f32 %v1638, %v1618
    %v1640 = vadd.f32 %v1639, %v1637
    %v1641 = vmax.f32 %v1640, 0.0
    %1642 = vxpose.xlu0.b32.start [1/16] %v1641, 128
    %1643 = vxpose.xlu0.b32.cont [2/16] 0.0, 128
    %1644 = vxpose.xlu0.b32.cont [3/16] 0.0, 128
    %1645 = vxpose.xlu0.b32.cont [4/16] 0.0, 128
    %1646 = vxpose.xlu0.b32.cont [5/16] 0.0, 128
    %1647 = vxpose.xlu0.b32.cont [6/16] 0.0, 128
    %1648 = vxpose.xlu0.b32.cont [7/16] 0.0, 128
    %1649 = vxpose.xlu0.b32.cont [8/16] 0.0, 128
    %1650 = vxpose.xlu0.b32.cont [9/16] 0.0, 128
    %1651 = vxpose.xlu0.b32.cont [10/16] 0.0, 128
    %1652 = vxpose.xlu0.b32.cont [11/16] 0.0, 128
    %1653 = vxpose.xlu0.b32.cont [12/16] 0.0, 128
    %1654 = vxpose.xlu0.b32.cont [13/16] 0.0, 128
    %1655 = vxpose.xlu0.b32.cont [14/16] 0.0, 128
    %1656 = vxpose.xlu0.b32.cont [15/16] 0.0, 128
    %1657 = vxpose.xlu0.b32.end [16/16] 0.0, 128
    %v1658 = vpop.trf.xlu0
    %v1659 = vpop.trf.xlu0
    %v1660 = vpop.trf.xlu0
    %v1661 = vpop.trf.xlu0
    %v1662 = vpop.trf.xlu0
    %v1663 = vpop.trf.xlu0
    %v1664 = vpop.trf.xlu0
    %v1665 = vpop.trf.xlu0
    %v1666 = vpop.trf.xlu0
    %v1667 = vpop.trf.xlu0
    %v1668 = vpop.trf.xlu0
    %v1669 = vpop.trf.xlu0
    %v1670 = vpop.trf.xlu0
    %v1671 = vpop.trf.xlu0
    %v1672 = vpop.trf.xlu0
    %v1673 = vpop.trf.xlu0
    %vm1674 = vcmask 57344
    %1675 = vst.msk [vmem:[#allocation10] sm:$0x1] %vm1674, %v1658
    // Predicated region
    $region34: #{tpu_custom_call.1} parent=1 // pred_check
      _
    $region35: #{tpu_custom_call.1} parent=1 // pred_check_branch
      %1677 = sbr.rel (0) target = $region37
    $region36: #{tpu_custom_call.1} parent=1 // pred_region
      %s1679 = ssub.s32 16, 16
      %1680 = vsyncadd [#allocation6], %s1679
      %s1682 = sshll.u32 [#allocation10], 4
      %s1683 = int_to_ptr.vmem [resolvable:$true] %s1682
      %1685 = dma.vmem_to_hbm [thread:$0]  %s1683, 16, %s5, [#allocation6]
    $region37: #{tpu_custom_call.1} parent=1 // pred_fallthru
      _
    // Predicated region
    $region38: #{tpu_custom_call.1} parent=1 // pred_check
      _
    $region39: #{tpu_custom_call.1} parent=1 // pred_check_branch
      %1687 = sbr.rel (0) target = $region41
    $region40: #{tpu_custom_call.1} parent=1 // pred_region
      %1688 = dma.done [#allocation6], 16
    $region41: #{tpu_custom_call.1} parent=1 // pred_fallthru
      _
    %1689 = vsyncpa [#allocation5], 1
    %1690 = vsyncpa [#allocation8], 1
    %1691 = vsyncpa [#allocation6], 1

</llo_original>
